<compile_context>
chip_gen: v6e
topology: v6e:2x2x1
jax: 0.10.0
libtpu: 0.0.40
codegen_flags: <defaults>
</compile_context>

<pallas_src>
import jax
import jax.numpy as jnp
from jax.experimental import pallas as pl
from jax.experimental.pallas import tpu as pltpu

EPS = 1e-5


def _toeplitz_weights(w_oihw, W):
    """(Cout, Cin, 3, 3) OIHW -> (3, W*Cin, W*Cout) bf16 banded matrices.

    T[ky, xi*Cin + ci, xo*Cout + co] = w[co, ci, ky, xi + 1 - xo] when
    0 <= xi + 1 - xo <= 2, else 0.  A row-slab matmul
        out[(n,y), xo*Cout+co] += x[(n, y+ky-1), xi*Cin+ci] @ T[ky]
    then realises the 3x3 convolution; zero-padding along W is implicit in
    the band structure (missing taps at xo=0 / xo=W-1 are simply absent).
    """
    Cout, Cin, _, _ = w_oihw.shape
    w = jnp.transpose(w_oihw, (2, 3, 1, 0)).astype(jnp.float32)   # (ky,kx,ci,co)
    xi = jnp.arange(W)[:, None]              # input column
    xo = jnp.arange(W)[None, :]              # output column
    kx = xi + 1 - xo
    valid = (kx >= 0) & (kx <= 2)
    band = jnp.where(valid[None, :, :, None, None],
                     w[:, jnp.clip(kx, 0, 2)], 0.0)   # (3, W, W, Cin, Cout)
    return jnp.transpose(band, (0, 1, 3, 2, 4)).reshape(
        3, W * Cin, W * Cout).astype(jnp.bfloat16)


@jax.jit
def double_conv2d(x_nchw, w1_oihw, g1, b1, w2_oihw, g2, b2):
    """Forward of DoubleConv2d.  x_nchw: (N, Cin, H, W) f32; returns NCHW f32."""
    N, Cin, H, W = x_nchw.shape
    Cout = w1_oihw.shape[0]
    Hp = H + 2
    inv_m = 1.0 / float(N * H * W)

    # ---- wrapper-side layout prep (tiny XLA ops) ----
    # NCHW -> (N, H, W*Cin): channels fastest along lanes; bf16 MXU operand.
    x = jnp.transpose(x_nchw, (0, 2, 3, 1)).reshape(
        N, H, W * Cin).astype(jnp.bfloat16)
    t1 = _toeplitz_weights(w1_oihw, W)            # (3, W*Cin,  W*Cout) bf16
    t2 = _toeplitz_weights(w2_oihw, W)            # (3, W*Cout, W*Cout) bf16
    # 0/1 projector: (1, W*Cout) row-sums @ proj -> per-channel sums broadcast
    # back to every x position of the (x, c) lane layout (BN reduce on MXU).
    ch = jnp.arange(W * Cout) % Cout
    proj = (ch[:, None] == ch[None, :]).astype(jnp.float32)   # (W*Cout, W*Cout)
    tile_c = lambda v: jnp.tile(v.astype(jnp.float32).reshape(1, Cout), (1, W))
    g1t, b1t, g2t, b2t = tile_c(g1), tile_c(b1), tile_c(g2), tile_c(b2)

    def kernel(x_ref, t1_ref, g1_ref, b1_ref, t2_ref, g2_ref, b2_ref,
               proj_ref, out_ref, pad1_ref, pad2_ref):
        NH = N * H

        def conv3x3(pad_ref, t_ref, k):
            # 3 accumulating MXU matmuls over contiguous row slabs; kx taps and
            # the channel contraction live in the banded weight (dense K = k).
            acc = jnp.zeros((NH, W * Cout), jnp.float32)
            for ky in range(3):
                a = pad_ref[:, ky:ky + H, :].reshape(NH, k)          # bf16
                acc = acc + jnp.dot(a, t_ref[ky],
                                    preferred_element_type=jnp.float32)
            return acc

        def bn_relu(y, gamma_t, beta_t):
            # Train-mode BatchNorm (biased batch var) + ReLU on (NH, W*Cout)
            # f32.  Row reduce is only NH=32 sublanes; the over-W reduce and
            # the broadcast back to (x, c) lanes ride the MXU via `proj`.
            rowsum = jnp.sum(y, axis=0, keepdims=True)
            mean_b = jnp.dot(rowsum, proj_ref[...],
                             preferred_element_type=jnp.float32) * inv_m
            d = y - mean_b                                           # reused
            sqsum = jnp.sum(d * d, axis=0, keepdims=True)
            var_b = jnp.dot(sqsum, proj_ref[...],
                            preferred_element_type=jnp.float32) * inv_m
            scale_b = gamma_t * jax.lax.rsqrt(var_b + EPS)           # EUP
            return jnp.maximum(d * scale_b + beta_t, 0.0)

        # ---- conv1 -> bn1 -> relu ----
        zrow1 = jnp.zeros((N, 1, W * Cin), jnp.bfloat16)
        pad1_ref[:, 0:1, :] = zrow1            # H halo rows only; W padding is
        pad1_ref[:, H + 1:H + 2, :] = zrow1    # implicit in the banded weight.
        pad1_ref[:, 1:H + 1, :] = x_ref[...]
        y1 = bn_relu(conv3x3(pad1_ref, t1_ref, W * Cin),
                     g1_ref[...], b1_ref[...])

        # ---- conv2 -> bn2 -> relu ----
        zrow2 = jnp.zeros((N, 1, W * Cout), jnp.bfloat16)
        pad2_ref[:, 0:1, :] = zrow2
        pad2_ref[:, H + 1:H + 2, :] = zrow2
        pad2_ref[:, 1:H + 1, :] = y1.reshape(N, H, W * Cout).astype(jnp.bfloat16)
        y2 = bn_relu(conv3x3(pad2_ref, t2_ref, W * Cout),
                     g2_ref[...], b2_ref[...])

        out_ref[...] = y2.reshape(N, H, W * Cout)   # lane-dense 128-wide store

    def full(shape):
        return pl.BlockSpec(shape, lambda i: (0,) * len(shape))

    out = pl.pallas_call(
        kernel,
        out_shape=jax.ShapeDtypeStruct((N, H, W * Cout), jnp.float32),
        grid_spec=pltpu.PrefetchScalarGridSpec(
            num_scalar_prefetch=0,
            grid=(1,),
            in_specs=[full(x.shape),
                      full(t1.shape), full(g1t.shape), full(b1t.shape),
                      full(t2.shape), full(g2t.shape), full(b2t.shape),
                      full(proj.shape)],
            out_specs=full((N, H, W * Cout)),
            scratch_shapes=[
                pltpu.VMEM((N, Hp, W * Cin), jnp.bfloat16),    # padded rows, conv1
                pltpu.VMEM((N, Hp, W * Cout), jnp.bfloat16),   # padded rows, conv2
            ],
        ),
        compiler_params=pltpu.CompilerParams(
            dimension_semantics=("arbitrary",),
            vmem_limit_bytes=32 * 1024 * 1024),
    )(x, t1, g1t, b1t, t2, g2t, b2t, proj)

    # (N, H, W*Cout) -> NCHW
    return jnp.transpose(out.reshape(N, H, W, Cout), (0, 3, 1, 2))


def _reference(x_nchw, w1, g1, b1, w2, g2, b2):
    """Plain-JAX f32 reference matching PyTorch training-mode forward."""
    def conv(x, w):
        return jax.lax.conv_general_dilated(
            x, w, window_strides=(1, 1), padding=((1, 1), (1, 1)),
            dimension_numbers=("NCHW", "OIHW", "NCHW"))

    def bn_relu(y, g, b):
        mean = jnp.mean(y, axis=(0, 2, 3), keepdims=True)
        var = jnp.mean((y - mean) ** 2, axis=(0, 2, 3), keepdims=True)
        yn = (y - mean) * jax.lax.rsqrt(var + EPS)
        return jnp.maximum(yn * g.reshape(1, -1, 1, 1) + b.reshape(1, -1, 1, 1),
                           0.0)

    y = bn_relu(conv(x_nchw, w1), g1, b1)
    return bn_relu(conv(y, w2), g2, b2)


if __name__ == "__main__":
    N, Cin, Cout, H, W = 2, 4, 8, 16, 16

    key = jax.random.PRNGKey(0)
    kx, kw1, kw2 = jax.random.split(key, 3)

    x = jax.random.normal(kx, (N, Cin, H, W), jnp.float32)
    # Deterministic synthetic init (fan-in scaled), PyTorch OIHW weight shape.
    w1 = jax.random.normal(kw1, (Cout, Cin, 3, 3), jnp.float32) / (Cin * 9) ** 0.5
    w2 = jax.random.normal(kw2, (Cout, Cout, 3, 3), jnp.float32) / (Cout * 9) ** 0.5
    # BatchNorm2d default affine params: gamma = 1, beta = 0.
    g1 = jnp.ones((Cout,), jnp.float32)
    b1 = jnp.zeros((Cout,), jnp.float32)
    g2 = jnp.ones((Cout,), jnp.float32)
    b2 = jnp.zeros((Cout,), jnp.float32)

    out = jax.block_until_ready(double_conv2d(x, w1, g1, b1, w2, g2, b2))
    ref = _reference(x, w1, g1, b1, w2, g2, b2)

    assert out.shape == (N, Cout, H, W)
    # bf16 conv operands (f32 accumulation, f32 BN stats) vs. a pure-f32
    # reference through two conv+BN stages -> bf16-appropriate tolerance.
    max_err = float(jnp.max(jnp.abs(out - ref)))
    assert jnp.allclose(out, ref, rtol=3e-2, atol=4e-2), max_err

    print("KERNEL_OK")
</pallas_src>

<mosaic_0001>
module attributes {stable_mosaic.version = 11 : i64} {
  func.func @kernel(%arg0: i32, %arg1: memref<2x16x64xbf16, #tpu.memory_space<vmem>>, %arg2: memref<3x64x128xbf16, #tpu.memory_space<vmem>>, %arg3: memref<1x128xf32, #tpu.memory_space<vmem>>, %arg4: memref<1x128xf32, #tpu.memory_space<vmem>>, %arg5: memref<3x128x128xbf16, #tpu.memory_space<vmem>>, %arg6: memref<1x128xf32, #tpu.memory_space<vmem>>, %arg7: memref<1x128xf32, #tpu.memory_space<vmem>>, %arg8: memref<128x128xf32, #tpu.memory_space<vmem>>, %arg9: memref<2x16x128xf32, #tpu.memory_space<vmem>>, %arg10: memref<2x18x64xbf16, #tpu.memory_space<vmem>>, %arg11: memref<2x18x128xbf16, #tpu.memory_space<vmem>>) attributes {dimension_semantics = [#tpu.dimension_semantics<arbitrary>], iteration_bounds = array<i64: 1>, scalar_prefetch = 0 : i64, scratch_operands = 2 : i64, tpu.core_type = #tpu.core_type<tc>, window_params = [{pipeline_mode = #tpu.pipeline_mode<synchronous>, transform_indices = @transform_0, window_bounds = array<i64: 2, 16, 64>}, {pipeline_mode = #tpu.pipeline_mode<synchronous>, transform_indices = @transform_1, window_bounds = array<i64: 3, 64, 128>}, {pipeline_mode = #tpu.pipeline_mode<synchronous>, transform_indices = @transform_2, window_bounds = array<i64: 1, 128>}, {pipeline_mode = #tpu.pipeline_mode<synchronous>, transform_indices = @transform_3, window_bounds = array<i64: 1, 128>}, {pipeline_mode = #tpu.pipeline_mode<synchronous>, transform_indices = @transform_4, window_bounds = array<i64: 3, 128, 128>}, {pipeline_mode = #tpu.pipeline_mode<synchronous>, transform_indices = @transform_5, window_bounds = array<i64: 1, 128>}, {pipeline_mode = #tpu.pipeline_mode<synchronous>, transform_indices = @transform_6, window_bounds = array<i64: 1, 128>}, {pipeline_mode = #tpu.pipeline_mode<synchronous>, transform_indices = @transform_7, window_bounds = array<i64: 128, 128>}, {pipeline_mode = #tpu.pipeline_mode<synchronous>, transform_indices = @transform_8, window_bounds = array<i64: 2, 16, 128>}]} {
    %cst = arith.constant 0.000000e+00 : bf16
    %0 = vector.broadcast %cst : bf16 to vector<2x1x64xbf16>
    %c0 = arith.constant 0 : index
    %c0_0 = arith.constant 0 : index
    %c0_1 = arith.constant 0 : index
    %1 = vector.load %arg10[%c0, %c0_0, %c0_1] : memref<2x18x64xbf16, #tpu.memory_space<vmem>>, vector<2x1x64xbf16>
    tpu.vector_store %arg10[%c0, %c0_0, %c0_1], %0 {strides = array<i32>} : memref<2x18x64xbf16, #tpu.memory_space<vmem>>, vector<2x1x64xbf16>,
    %c0_2 = arith.constant 0 : index
    %c17 = arith.constant 17 : index
    %c0_3 = arith.constant 0 : index
    %2 = vector.load %arg10[%c0_2, %c17, %c0_3] : memref<2x18x64xbf16, #tpu.memory_space<vmem>>, vector<2x1x64xbf16>
    tpu.vector_store %arg10[%c0_2, %c17, %c0_3], %0 {strides = array<i32>} : memref<2x18x64xbf16, #tpu.memory_space<vmem>>, vector<2x1x64xbf16>,
    %c0_4 = arith.constant 0 : index
    %c0_5 = arith.constant 0 : index
    %c0_6 = arith.constant 0 : index
    %3 = vector.load %arg1[%c0_4, %c0_5, %c0_6] : memref<2x16x64xbf16, #tpu.memory_space<vmem>>, vector<2x16x64xbf16>
    %c0_7 = arith.constant 0 : index
    %c1 = arith.constant 1 : index
    %c0_8 = arith.constant 0 : index
    %4 = vector.load %arg10[%c0_7, %c1, %c0_8] : memref<2x18x64xbf16, #tpu.memory_space<vmem>>, vector<2x16x64xbf16>
    tpu.vector_store %arg10[%c0_7, %c1, %c0_8], %3 {strides = array<i32>} : memref<2x18x64xbf16, #tpu.memory_space<vmem>>, vector<2x16x64xbf16>,
    %cst_9 = arith.constant 0.000000e+00 : f32
    %5 = vector.broadcast %cst_9 : f32 to vector<32x128xf32>
    %c0_10 = arith.constant 0 : index
    %c0_11 = arith.constant 0 : index
    %c0_12 = arith.constant 0 : index
    %6 = vector.load %arg10[%c0_10, %c0_11, %c0_12] : memref<2x18x64xbf16, #tpu.memory_space<vmem>>, vector<2x16x64xbf16>
    %7 = vector.shape_cast %6 : vector<2x16x64xbf16> to vector<32x64xbf16>
    %c0_13 = arith.constant 0 : index
    %c0_14 = arith.constant 0 : index
    %c0_15 = arith.constant 0 : index
    %8 = vector.load %arg2[%c0_13, %c0_14, %c0_15] : memref<3x64x128xbf16, #tpu.memory_space<vmem>>, vector<1x64x128xbf16>
    %9 = vector.shape_cast %8 : vector<1x64x128xbf16> to vector<64x128xbf16>
    %cst_16 = arith.constant dense<0.000000e+00> : vector<32x128xf32>
    %10 = tpu.matmul %7, %9, %cst_16 {dimension_numbers = #tpu.dot_dimension_numbers<[1], [0], [0], [1], [0, 0, 1, 1], [], []>} : vector<32x64xbf16>, vector<64x128xbf16>, vector<32x128xf32> -> vector<32x128xf32>
    %11 = arith.addf %5, %10 : vector<32x128xf32>
    %c0_17 = arith.constant 0 : index
    %c1_18 = arith.constant 1 : index
    %c0_19 = arith.constant 0 : index
    %12 = vector.load %arg10[%c0_17, %c1_18, %c0_19] : memref<2x18x64xbf16, #tpu.memory_space<vmem>>, vector<2x16x64xbf16>
    %13 = vector.shape_cast %12 : vector<2x16x64xbf16> to vector<32x64xbf16>
    %c1_20 = arith.constant 1 : index
    %c0_21 = arith.constant 0 : index
    %c0_22 = arith.constant 0 : index
    %14 = vector.load %arg2[%c1_20, %c0_21, %c0_22] : memref<3x64x128xbf16, #tpu.memory_space<vmem>>, vector<1x64x128xbf16>
    %15 = vector.shape_cast %14 : vector<1x64x128xbf16> to vector<64x128xbf16>
    %cst_23 = arith.constant dense<0.000000e+00> : vector<32x128xf32>
    %16 = tpu.matmul %13, %15, %cst_23 {dimension_numbers = #tpu.dot_dimension_numbers<[1], [0], [0], [1], [0, 0, 1, 1], [], []>} : vector<32x64xbf16>, vector<64x128xbf16>, vector<32x128xf32> -> vector<32x128xf32>
    %17 = arith.addf %11, %16 : vector<32x128xf32>
    %c0_24 = arith.constant 0 : index
    %c2 = arith.constant 2 : index
    %c0_25 = arith.constant 0 : index
    %18 = vector.load %arg10[%c0_24, %c2, %c0_25] : memref<2x18x64xbf16, #tpu.memory_space<vmem>>, vector<2x16x64xbf16>
    %19 = vector.shape_cast %18 : vector<2x16x64xbf16> to vector<32x64xbf16>
    %c2_26 = arith.constant 2 : index
    %c0_27 = arith.constant 0 : index
    %c0_28 = arith.constant 0 : index
    %20 = vector.load %arg2[%c2_26, %c0_27, %c0_28] : memref<3x64x128xbf16, #tpu.memory_space<vmem>>, vector<1x64x128xbf16>
    %21 = vector.shape_cast %20 : vector<1x64x128xbf16> to vector<64x128xbf16>
    %cst_29 = arith.constant dense<0.000000e+00> : vector<32x128xf32>
    %22 = tpu.matmul %19, %21, %cst_29 {dimension_numbers = #tpu.dot_dimension_numbers<[1], [0], [0], [1], [0, 0, 1, 1], [], []>} : vector<32x64xbf16>, vector<64x128xbf16>, vector<32x128xf32> -> vector<32x128xf32>
    %23 = arith.addf %17, %22 : vector<32x128xf32>
    %c0_30 = arith.constant 0 : index
    %c0_31 = arith.constant 0 : index
    %24 = vector.load %arg3[%c0_30, %c0_31] : memref<1x128xf32, #tpu.memory_space<vmem>>, vector<1x128xf32>
    %c0_32 = arith.constant 0 : index
    %c0_33 = arith.constant 0 : index
    %25 = vector.load %arg4[%c0_32, %c0_33] : memref<1x128xf32, #tpu.memory_space<vmem>>, vector<1x128xf32>
    %cst_34 = arith.constant dense<0.000000e+00> : vector<128xf32>
    %26 = vector.multi_reduction <add>, %23, %cst_34 [0] : vector<32x128xf32> to vector<128xf32>
    %27 = vector.shape_cast %26 : vector<128xf32> to vector<1x128xf32>
    %c0_35 = arith.constant 0 : index
    %c0_36 = arith.constant 0 : index
    %28 = vector.load %arg8[%c0_35, %c0_36] : memref<128x128xf32, #tpu.memory_space<vmem>>, vector<128x128xf32>
    %cst_37 = arith.constant dense<0.000000e+00> : vector<1x128xf32>
    %29 = tpu.matmul %27, %28, %cst_37 {dimension_numbers = #tpu.dot_dimension_numbers<[1], [0], [0], [1], [0, 0, 1, 1], [], []>} : vector<1x128xf32>, vector<128x128xf32>, vector<1x128xf32> -> vector<1x128xf32>
    %cst_38 = arith.constant 0.001953125 : f32
    %30 = vector.broadcast %cst_38 : f32 to vector<1x128xf32>
    %31 = arith.mulf %29, %30 : vector<1x128xf32>
    %32 = vector.broadcast %31 : vector<1x128xf32> to vector<32x128xf32>
    %33 = arith.subf %23, %32 : vector<32x128xf32>
    %34 = arith.mulf %33, %33 : vector<32x128xf32>
    %cst_39 = arith.constant dense<0.000000e+00> : vector<128xf32>
    %35 = vector.multi_reduction <add>, %34, %cst_39 [0] : vector<32x128xf32> to vector<128xf32>
    %36 = vector.shape_cast %35 : vector<128xf32> to vector<1x128xf32>
    %c0_40 = arith.constant 0 : index
    %c0_41 = arith.constant 0 : index
    %37 = vector.load %arg8[%c0_40, %c0_41] : memref<128x128xf32, #tpu.memory_space<vmem>>, vector<128x128xf32>
    %cst_42 = arith.constant dense<0.000000e+00> : vector<1x128xf32>
    %38 = tpu.matmul %36, %37, %cst_42 {dimension_numbers = #tpu.dot_dimension_numbers<[1], [0], [0], [1], [0, 0, 1, 1], [], []>} : vector<1x128xf32>, vector<128x128xf32>, vector<1x128xf32> -> vector<1x128xf32>
    %cst_43 = arith.constant 0.001953125 : f32
    %39 = vector.broadcast %cst_43 : f32 to vector<1x128xf32>
    %40 = arith.mulf %38, %39 : vector<1x128xf32>
    %cst_44 = arith.constant 9.99999974E-6 : f32
    %41 = vector.broadcast %cst_44 : f32 to vector<1x128xf32>
    %42 = arith.addf %40, %41 : vector<1x128xf32>
    %43 = math.rsqrt %42 : vector<1x128xf32>
    %44 = arith.mulf %24, %43 : vector<1x128xf32>
    %45 = vector.broadcast %44 : vector<1x128xf32> to vector<32x128xf32>
    %46 = arith.mulf %33, %45 : vector<32x128xf32>
    %47 = vector.broadcast %25 : vector<1x128xf32> to vector<32x128xf32>
    %48 = arith.addf %46, %47 : vector<32x128xf32>
    %cst_45 = arith.constant 0.000000e+00 : f32
    %49 = vector.broadcast %cst_45 : f32 to vector<32x128xf32>
    %50 = arith.maximumf %48, %49 : vector<32x128xf32>
    %cst_46 = arith.constant 0.000000e+00 : bf16
    %51 = vector.broadcast %cst_46 : bf16 to vector<2x1x128xbf16>
    %c0_47 = arith.constant 0 : index
    %c0_48 = arith.constant 0 : index
    %c0_49 = arith.constant 0 : index
    %52 = vector.load %arg11[%c0_47, %c0_48, %c0_49] : memref<2x18x128xbf16, #tpu.memory_space<vmem>>, vector<2x1x128xbf16>
    tpu.vector_store %arg11[%c0_47, %c0_48, %c0_49], %51 {strides = array<i32>} : memref<2x18x128xbf16, #tpu.memory_space<vmem>>, vector<2x1x128xbf16>,
    %c0_50 = arith.constant 0 : index
    %c17_51 = arith.constant 17 : index
    %c0_52 = arith.constant 0 : index
    %53 = vector.load %arg11[%c0_50, %c17_51, %c0_52] : memref<2x18x128xbf16, #tpu.memory_space<vmem>>, vector<2x1x128xbf16>
    tpu.vector_store %arg11[%c0_50, %c17_51, %c0_52], %51 {strides = array<i32>} : memref<2x18x128xbf16, #tpu.memory_space<vmem>>, vector<2x1x128xbf16>,
    %54 = vector.shape_cast %50 : vector<32x128xf32> to vector<2x16x128xf32>
    %55 = arith.truncf %54 : vector<2x16x128xf32> to vector<2x16x128xbf16>
    %c0_53 = arith.constant 0 : index
    %c1_54 = arith.constant 1 : index
    %c0_55 = arith.constant 0 : index
    %56 = vector.load %arg11[%c0_53, %c1_54, %c0_55] : memref<2x18x128xbf16, #tpu.memory_space<vmem>>, vector<2x16x128xbf16>
    tpu.vector_store %arg11[%c0_53, %c1_54, %c0_55], %55 {strides = array<i32>} : memref<2x18x128xbf16, #tpu.memory_space<vmem>>, vector<2x16x128xbf16>,
    %cst_56 = arith.constant 0.000000e+00 : f32
    %57 = vector.broadcast %cst_56 : f32 to vector<32x128xf32>
    %c0_57 = arith.constant 0 : index
    %c0_58 = arith.constant 0 : index
    %c0_59 = arith.constant 0 : index
    %58 = vector.load %arg11[%c0_57, %c0_58, %c0_59] : memref<2x18x128xbf16, #tpu.memory_space<vmem>>, vector<2x16x128xbf16>
    %59 = vector.shape_cast %58 : vector<2x16x128xbf16> to vector<32x128xbf16>
    %c0_60 = arith.constant 0 : index
    %c0_61 = arith.constant 0 : index
    %c0_62 = arith.constant 0 : index
    %60 = vector.load %arg5[%c0_60, %c0_61, %c0_62] : memref<3x128x128xbf16, #tpu.memory_space<vmem>>, vector<1x128x128xbf16>
    %61 = vector.shape_cast %60 : vector<1x128x128xbf16> to vector<128x128xbf16>
    %cst_63 = arith.constant dense<0.000000e+00> : vector<32x128xf32>
    %62 = tpu.matmul %59, %61, %cst_63 {dimension_numbers = #tpu.dot_dimension_numbers<[1], [0], [0], [1], [0, 0, 1, 1], [], []>} : vector<32x128xbf16>, vector<128x128xbf16>, vector<32x128xf32> -> vector<32x128xf32>
    %63 = arith.addf %57, %62 : vector<32x128xf32>
    %c0_64 = arith.constant 0 : index
    %c1_65 = arith.constant 1 : index
    %c0_66 = arith.constant 0 : index
    %64 = vector.load %arg11[%c0_64, %c1_65, %c0_66] : memref<2x18x128xbf16, #tpu.memory_space<vmem>>, vector<2x16x128xbf16>
    %65 = vector.shape_cast %64 : vector<2x16x128xbf16> to vector<32x128xbf16>
    %c1_67 = arith.constant 1 : index
    %c0_68 = arith.constant 0 : index
    %c0_69 = arith.constant 0 : index
    %66 = vector.load %arg5[%c1_67, %c0_68, %c0_69] : memref<3x128x128xbf16, #tpu.memory_space<vmem>>, vector<1x128x128xbf16>
    %67 = vector.shape_cast %66 : vector<1x128x128xbf16> to vector<128x128xbf16>
    %cst_70 = arith.constant dense<0.000000e+00> : vector<32x128xf32>
    %68 = tpu.matmul %65, %67, %cst_70 {dimension_numbers = #tpu.dot_dimension_numbers<[1], [0], [0], [1], [0, 0, 1, 1], [], []>} : vector<32x128xbf16>, vector<128x128xbf16>, vector<32x128xf32> -> vector<32x128xf32>
    %69 = arith.addf %63, %68 : vector<32x128xf32>
    %c0_71 = arith.constant 0 : index
    %c2_72 = arith.constant 2 : index
    %c0_73 = arith.constant 0 : index
    %70 = vector.load %arg11[%c0_71, %c2_72, %c0_73] : memref<2x18x128xbf16, #tpu.memory_space<vmem>>, vector<2x16x128xbf16>
    %71 = vector.shape_cast %70 : vector<2x16x128xbf16> to vector<32x128xbf16>
    %c2_74 = arith.constant 2 : index
    %c0_75 = arith.constant 0 : index
    %c0_76 = arith.constant 0 : index
    %72 = vector.load %arg5[%c2_74, %c0_75, %c0_76] : memref<3x128x128xbf16, #tpu.memory_space<vmem>>, vector<1x128x128xbf16>
    %73 = vector.shape_cast %72 : vector<1x128x128xbf16> to vector<128x128xbf16>
    %cst_77 = arith.constant dense<0.000000e+00> : vector<32x128xf32>
    %74 = tpu.matmul %71, %73, %cst_77 {dimension_numbers = #tpu.dot_dimension_numbers<[1], [0], [0], [1], [0, 0, 1, 1], [], []>} : vector<32x128xbf16>, vector<128x128xbf16>, vector<32x128xf32> -> vector<32x128xf32>
    %75 = arith.addf %69, %74 : vector<32x128xf32>
    %c0_78 = arith.constant 0 : index
    %c0_79 = arith.constant 0 : index
    %76 = vector.load %arg6[%c0_78, %c0_79] : memref<1x128xf32, #tpu.memory_space<vmem>>, vector<1x128xf32>
    %c0_80 = arith.constant 0 : index
    %c0_81 = arith.constant 0 : index
    %77 = vector.load %arg7[%c0_80, %c0_81] : memref<1x128xf32, #tpu.memory_space<vmem>>, vector<1x128xf32>
    %cst_82 = arith.constant dense<0.000000e+00> : vector<128xf32>
    %78 = vector.multi_reduction <add>, %75, %cst_82 [0] : vector<32x128xf32> to vector<128xf32>
    %79 = vector.shape_cast %78 : vector<128xf32> to vector<1x128xf32>
    %c0_83 = arith.constant 0 : index
    %c0_84 = arith.constant 0 : index
    %80 = vector.load %arg8[%c0_83, %c0_84] : memref<128x128xf32, #tpu.memory_space<vmem>>, vector<128x128xf32>
    %cst_85 = arith.constant dense<0.000000e+00> : vector<1x128xf32>
    %81 = tpu.matmul %79, %80, %cst_85 {dimension_numbers = #tpu.dot_dimension_numbers<[1], [0], [0], [1], [0, 0, 1, 1], [], []>} : vector<1x128xf32>, vector<128x128xf32>, vector<1x128xf32> -> vector<1x128xf32>
    %cst_86 = arith.constant 0.001953125 : f32
    %82 = vector.broadcast %cst_86 : f32 to vector<1x128xf32>
    %83 = arith.mulf %81, %82 : vector<1x128xf32>
    %84 = vector.broadcast %83 : vector<1x128xf32> to vector<32x128xf32>
    %85 = arith.subf %75, %84 : vector<32x128xf32>
    %86 = arith.mulf %85, %85 : vector<32x128xf32>
    %cst_87 = arith.constant dense<0.000000e+00> : vector<128xf32>
    %87 = vector.multi_reduction <add>, %86, %cst_87 [0] : vector<32x128xf32> to vector<128xf32>
    %88 = vector.shape_cast %87 : vector<128xf32> to vector<1x128xf32>
    %c0_88 = arith.constant 0 : index
    %c0_89 = arith.constant 0 : index
    %89 = vector.load %arg8[%c0_88, %c0_89] : memref<128x128xf32, #tpu.memory_space<vmem>>, vector<128x128xf32>
    %cst_90 = arith.constant dense<0.000000e+00> : vector<1x128xf32>
    %90 = tpu.matmul %88, %89, %cst_90 {dimension_numbers = #tpu.dot_dimension_numbers<[1], [0], [0], [1], [0, 0, 1, 1], [], []>} : vector<1x128xf32>, vector<128x128xf32>, vector<1x128xf32> -> vector<1x128xf32>
    %cst_91 = arith.constant 0.001953125 : f32
    %91 = vector.broadcast %cst_91 : f32 to vector<1x128xf32>
    %92 = arith.mulf %90, %91 : vector<1x128xf32>
    %cst_92 = arith.constant 9.99999974E-6 : f32
    %93 = vector.broadcast %cst_92 : f32 to vector<1x128xf32>
    %94 = arith.addf %92, %93 : vector<1x128xf32>
    %95 = math.rsqrt %94 : vector<1x128xf32>
    %96 = arith.mulf %76, %95 : vector<1x128xf32>
    %97 = vector.broadcast %96 : vector<1x128xf32> to vector<32x128xf32>
    %98 = arith.mulf %85, %97 : vector<32x128xf32>
    %99 = vector.broadcast %77 : vector<1x128xf32> to vector<32x128xf32>
    %100 = arith.addf %98, %99 : vector<32x128xf32>
    %cst_93 = arith.constant 0.000000e+00 : f32
    %101 = vector.broadcast %cst_93 : f32 to vector<32x128xf32>
    %102 = arith.maximumf %100, %101 : vector<32x128xf32>
    %103 = vector.shape_cast %102 : vector<32x128xf32> to vector<2x16x128xf32>
    %c0_94 = arith.constant 0 : index
    %c0_95 = arith.constant 0 : index
    %c0_96 = arith.constant 0 : index
    %104 = vector.load %arg9[%c0_94, %c0_95, %c0_96] : memref<2x16x128xf32, #tpu.memory_space<vmem>>, vector<2x16x128xf32>
    tpu.vector_store %arg9[%c0_94, %c0_95, %c0_96], %103 {strides = array<i32>} : memref<2x16x128xf32, #tpu.memory_space<vmem>>, vector<2x16x128xf32>,
    return
  }
  func.func @transform_0(%arg0: i32) -> (i32, i32, i32) {
    %c0_i32 = arith.constant 0 : i32
    %c0_i32_0 = arith.constant 0 : i32
    %c0_i32_1 = arith.constant 0 : i32
    %c0_i32_2 = arith.constant 0 : i32
    return %c0_i32, %c0_i32_0, %c0_i32_1 : i32, i32, i32
  }
  func.func @transform_1(%arg0: i32) -> (i32, i32, i32) {
    %c0_i32 = arith.constant 0 : i32
    %c0_i32_0 = arith.constant 0 : i32
    %c0_i32_1 = arith.constant 0 : i32
    %c0_i32_2 = arith.constant 0 : i32
    return %c0_i32, %c0_i32_0, %c0_i32_1 : i32, i32, i32
  }
  func.func @transform_2(%arg0: i32) -> (i32, i32) {
    %c0_i32 = arith.constant 0 : i32
    %c0_i32_0 = arith.constant 0 : i32
    %c0_i32_1 = arith.constant 0 : i32
    return %c0_i32, %c0_i32_0 : i32, i32
  }
  func.func @transform_3(%arg0: i32) -> (i32, i32) {
    %c0_i32 = arith.constant 0 : i32
    %c0_i32_0 = arith.constant 0 : i32
    %c0_i32_1 = arith.constant 0 : i32
    return %c0_i32, %c0_i32_0 : i32, i32
  }
  func.func @transform_4(%arg0: i32) -> (i32, i32, i32) {
    %c0_i32 = arith.constant 0 : i32
    %c0_i32_0 = arith.constant 0 : i32
    %c0_i32_1 = arith.constant 0 : i32
    %c0_i32_2 = arith.constant 0 : i32
    return %c0_i32, %c0_i32_0, %c0_i32_1 : i32, i32, i32
  }
  func.func @transform_5(%arg0: i32) -> (i32, i32) {
    %c0_i32 = arith.constant 0 : i32
    %c0_i32_0 = arith.constant 0 : i32
    %c0_i32_1 = arith.constant 0 : i32
    return %c0_i32, %c0_i32_0 : i32, i32
  }
  func.func @transform_6(%arg0: i32) -> (i32, i32) {
    %c0_i32 = arith.constant 0 : i32
    %c0_i32_0 = arith.constant 0 : i32
    %c0_i32_1 = arith.constant 0 : i32
    return %c0_i32, %c0_i32_0 : i32, i32
  }
  func.func @transform_7(%arg0: i32) -> (i32, i32) {
    %c0_i32 = arith.constant 0 : i32
    %c0_i32_0 = arith.constant 0 : i32
    %c0_i32_1 = arith.constant 0 : i32
    return %c0_i32, %c0_i32_0 : i32, i32
  }
  func.func @transform_8(%arg0: i32) -> (i32, i32, i32) {
    %c0_i32 = arith.constant 0 : i32
    %c0_i32_0 = arith.constant 0 : i32
    %c0_i32_1 = arith.constant 0 : i32
    %c0_i32_2 = arith.constant 0 : i32
    return %c0_i32, %c0_i32_0, %c0_i32_1 : i32, i32, i32
  }
}

</mosaic_0001>

<llo_original>
// kernel: double_conv2d.1
$region0: #{double_conv2d.1}
  #allocation0 [shape = 'u32[]', space=smem, size = 0x4, offset = 0x4, fixed_abs, tag = 'smem constant byte address 0x4 - core index']
  #allocation1 [shape = 'u32[144,128]{1,0:T(1,128)}', space=vmem, size = 0x12000, scoped, tag = 'internal scratch']
  #allocation2 [shape = 'bf16[2,18,64]{2,1,0:T(8,128)(2,1)}', space=vmem, size = 0x3000, scoped, tag = 'scratch operand']
  #allocation3 [shape = 'bf16[2,18,128]{2,1,0:T(8,128)(2,1)}', space=vmem, size = 0x3000, scoped, tag = 'scratch operand']
  %s0 = inlined_call_operand.vmem [shape: bf16[2,16,64], index: 0, kind: input, shape index: {}]
  %s1 = inlined_call_operand.vmem [shape: bf16[3,64,128], index: 1, kind: input, shape index: {}]
  %s2 = inlined_call_operand.vmem [shape: f32[1,128], index: 2, kind: input, shape index: {}]
  %s3 = inlined_call_operand.vmem [shape: f32[1,128], index: 3, kind: input, shape index: {}]
  %s4 = inlined_call_operand.vmem [shape: bf16[3,128,128], index: 4, kind: input, shape index: {}]
  %s5 = inlined_call_operand.vmem [shape: f32[1,128], index: 5, kind: input, shape index: {}]
  %s6 = inlined_call_operand.vmem [shape: f32[1,128], index: 6, kind: input, shape index: {}]
  %s7 = inlined_call_operand.vmem [shape: f32[128,128], index: 7, kind: input, shape index: {}]
  %s8 = inlined_call_operand.vmem [shape: f32[2,16,128], index: 8, kind: output, shape index: {}]
  %s9 = sld [smem:[#allocation0]]
  $region42: #{double_conv2d.1} parent=0
    _
  %s11 = ssub.s32 1, %s9
  %s12 = scalar_select 0, %s11, %s9
  // Predicated region
  $region2: #{double_conv2d.1} parent=0 // pred_check
    _
  $region3: #{double_conv2d.1} parent=0 // pred_check_branch
    %14 = sbr.rel (0) target = $region5
  $region4: #{double_conv2d.1} parent=0 // pred_region
    _
  $region5: #{double_conv2d.1} parent=0 // pred_fallthru
    _
  // Predicated region
  $region6: #{double_conv2d.1} parent=0 // pred_check
    _
  $region7: #{double_conv2d.1} parent=0 // pred_check_branch
    %16 = sbr.rel (0) target = $region9
  $region8: #{double_conv2d.1} parent=0 // pred_region
    _
  $region9: #{double_conv2d.1} parent=0 // pred_fallthru
    _
  // Predicated region
  $region10: #{double_conv2d.1} parent=0 // pred_check
    _
  $region11: #{double_conv2d.1} parent=0 // pred_check_branch
    %18 = sbr.rel (0) target = $region13
  $region12: #{double_conv2d.1} parent=0 // pred_region
    _
  $region13: #{double_conv2d.1} parent=0 // pred_fallthru
    _
  // Predicated region
  $region14: #{double_conv2d.1} parent=0 // pred_check
    _
  $region15: #{double_conv2d.1} parent=0 // pred_check_branch
    %20 = sbr.rel (0) target = $region17
  $region16: #{double_conv2d.1} parent=0 // pred_region
    _
  $region17: #{double_conv2d.1} parent=0 // pred_fallthru
    _
  // Predicated region
  $region18: #{double_conv2d.1} parent=0 // pred_check
    _
  $region19: #{double_conv2d.1} parent=0 // pred_check_branch
    %22 = sbr.rel (0) target = $region21
  $region20: #{double_conv2d.1} parent=0 // pred_region
    _
  $region21: #{double_conv2d.1} parent=0 // pred_fallthru
    _
  // Predicated region
  $region22: #{double_conv2d.1} parent=0 // pred_check
    _
  $region23: #{double_conv2d.1} parent=0 // pred_check_branch
    %24 = sbr.rel (0) target = $region25
  $region24: #{double_conv2d.1} parent=0 // pred_region
    _
  $region25: #{double_conv2d.1} parent=0 // pred_fallthru
    _
  // Predicated region
  $region26: #{double_conv2d.1} parent=0 // pred_check
    _
  $region27: #{double_conv2d.1} parent=0 // pred_check_branch
    %26 = sbr.rel (0) target = $region29
  $region28: #{double_conv2d.1} parent=0 // pred_region
    _
  $region29: #{double_conv2d.1} parent=0 // pred_fallthru
    _
  // Predicated region
  $region30: #{double_conv2d.1} parent=0 // pred_check
    _
  $region31: #{double_conv2d.1} parent=0 // pred_check_branch
    %28 = sbr.rel (0) target = $region33
  $region32: #{double_conv2d.1} parent=0 // pred_region
    _
  $region33: #{double_conv2d.1} parent=0 // pred_fallthru
    _
  %vm30 = vcmask 516096
  %vm31 = vsmask.f32 256
  %vm32 = vmand %vm30, %vm31
  %v33 = vld [vmem:[#allocation2] sm:$0x1]
  %v34 = vsel %vm32, 0, %v33
  %35 = vst [vmem:[#allocation2] sm:$0x1] %v34
  %v36 = vld [vmem:[#allocation2 + $0xc] sm:$0x1]
  %v37 = vsel %vm32, 0, %v36
  %38 = vst [vmem:[#allocation2 + $0xc] sm:$0x1] %v37
  %vm39 = vsmask.f32 7938
  %vm40 = vmand %vm30, %vm39
  %v41 = vld [vmem:[#allocation2 + $0x8] sm:$0x1]
  %v42 = vsel %vm40, 0, %v41
  %43 = vst [vmem:[#allocation2 + $0x8] sm:$0x1] %v42
  %v44 = vld [vmem:[#allocation2 + $0x14] sm:$0x1]
  %v45 = vsel %vm40, 0, %v44
  %46 = vst [vmem:[#allocation2 + $0x14] sm:$0x1] %v45
  %v47 = vld [vmem:[%s0] sm:$0xf]
  %v48 = vld [vmem:[%s0 + $0x4] sm:$0xf]
  %v49 = vld [vmem:[%s0 + $0x8] sm:$0xf]
  %v50 = vld [vmem:[%s0 + $0xc] sm:$0xf]
  %vm51 = vsmask.f32 4368
  %vm52 = vmor %vm31, %vm51
  %v54 = vshrl.u32 %v47, 16
  %v56 = vrot.slane %v54, 7
  %v57 = vshll.u32 %v47, 16
  %v59 = vor.u32 %v56, %v57
  %v60 = vrot.slane %v56, 4
  %v62 = vshrl.u32 %v48, 16
  %v64 = vrot.slane %v62, 7
  %v65 = vshll.u32 %v48, 16
  %v67 = vor.u32 %v64, %v65
  %v68 = vsel %vm52, %v60, %v67
  %v69 = vrot.slane %v64, 4
  %v71 = vshrl.u32 %v49, 16
  %v73 = vrot.slane %v71, 7
  %v74 = vshll.u32 %v49, 16
  %v76 = vor.u32 %v73, %v74
  %v77 = vrot.slane %v73, 4
  %v79 = vshrl.u32 %v50, 16
  %v81 = vrot.slane %v79, 7
  %v82 = vshll.u32 %v50, 16
  %v84 = vor.u32 %v81, %v82
  %v85 = vsel %vm52, %v77, %v84
  %v86 = vrot.slane %v81, 4
  %vm93 = vcmask 519168
  %vm94 = vmand %vm93, %vm39
  %v95 = vld [vmem:[#allocation2] sm:$0xf]
  %v96 = vsel %vm94, %v59, %v95
  %97 = vst [vmem:[#allocation2] sm:$0xf] %v96
  %vm98 = vcmask 519168
  %99 = vst.msk [vmem:[#allocation2 + $0x4] sm:$0xf] %vm98, %v68
  %v100 = vld [vmem:[#allocation2 + $0x8] sm:$0x1]
  %v101 = vsel %vm32, %v69, %v100
  %102 = vst [vmem:[#allocation2 + $0x8] sm:$0x1] %v101
  %v103 = vld [vmem:[#allocation2 + $0xc] sm:$0xf]
  %v104 = vsel %vm94, %v76, %v103
  %105 = vst [vmem:[#allocation2 + $0xc] sm:$0xf] %v104
  %106 = vst.msk [vmem:[#allocation2 + $0x10] sm:$0xf] %vm98, %v85
  %v107 = vld [vmem:[#allocation2 + $0x14] sm:$0x1]
  %v108 = vsel %vm32, %v86, %v107
  %109 = vst [vmem:[#allocation2 + $0x14] sm:$0x1] %v108
  %v110 = vld [vmem:[#allocation2] sm:$0xf]
  %v111 = vld [vmem:[#allocation2 + $0x4] sm:$0xf]
  %v112 = vld [vmem:[#allocation2 + $0xc] sm:$0xf]
  %v113 = vld [vmem:[#allocation2 + $0x10] sm:$0xf]
  %v114 = vld [vmem:[%s1] sm:$0xf]
  %v115 = vld [vmem:[%s1 + $0x4] sm:$0xf]
  %v116 = vld [vmem:[%s1 + $0x8] sm:$0xf]
  %v117 = vld [vmem:[%s1 + $0xc] sm:$0xf]
  %v118 = vld [vmem:[%s1 + $0x10] sm:$0xf]
  %v119 = vld [vmem:[%s1 + $0x14] sm:$0xf]
  %v120 = vld [vmem:[%s1 + $0x18] sm:$0xf]
  %v121 = vld [vmem:[%s1 + $0x1c] sm:$0xf]
  %v122 = vld [vmem:[#allocation2 + $0x8] sm:$0x1]
  %v123 = vld [vmem:[#allocation2 + $0x14] sm:$0x1]
  %vm124 = vsmask.f32 3328
  %vm125 = vsmask.f32 7440
  %vm126 = vmor %vm124, %vm125
  %v128 = vshrl.u32 %v110, 16
  %v130 = vrot.slane %v128, 4
  %v131 = vshll.u32 %v110, 16
  %v133 = vrot.slane %v131, 5
  %v134 = vor.u32 %v130, %v133
  %v135 = vrot.slane %v134, 4
  %v137 = vshll.u32 %v111, 16
  %v139 = vrot.slane %v137, 5
  %v140 = vsel %vm126, %v135, %v139
  %v141 = vshrl.u32 %v111, 16
  %v143 = vrot.slane %v141, 4
  %v144 = vor.u32 %v143, %v139
  %v145 = vrot.slane %v144, 4
  %v147 = vshll.u32 %v122, 16
  %v149 = vrot.slane %v147, 5
  %v150 = vsel %vm126, %v145, %v149
  %v152 = vshrl.u32 %v112, 16
  %v154 = vrot.slane %v152, 4
  %v155 = vshll.u32 %v112, 16
  %v157 = vrot.slane %v155, 5
  %v158 = vor.u32 %v154, %v157
  %v159 = vrot.slane %v158, 4
  %v161 = vshll.u32 %v113, 16
  %v163 = vrot.slane %v161, 5
  %v164 = vsel %vm126, %v159, %v163
  %v165 = vshrl.u32 %v113, 16
  %v167 = vrot.slane %v165, 4
  %v168 = vor.u32 %v167, %v163
  %v169 = vrot.slane %v168, 4
  %v171 = vshll.u32 %v123, 16
  %v173 = vrot.slane %v171, 5
  %v174 = vsel %vm126, %v169, %v173
  %s175 = scalar_lea.vmem %s1, 32
  %v176 = vld [vmem:[%s175] sm:$0xf]
  %v177 = vld [vmem:[%s175 + $0x4] sm:$0xf]
  %v178 = vld [vmem:[%s175 + $0x8] sm:$0xf]
  %v179 = vld [vmem:[%s175 + $0xc] sm:$0xf]
  %v180 = vld [vmem:[%s175 + $0x10] sm:$0xf]
  %v181 = vld [vmem:[%s175 + $0x14] sm:$0xf]
  %v182 = vld [vmem:[%s175 + $0x18] sm:$0xf]
  %v183 = vld [vmem:[%s175 + $0x1c] sm:$0xf]
  %v184 = vunpack.c.l.b16 %v140
  %v185 = vunpack.c.l.b16 %v150
  %v186 = vunpack.c.l.b16 %v164
  %v187 = vunpack.c.l.b16 %v174
  %v188 = vpack.c.b16 %v185, %v184
  %v189 = vpack.c.b16 %v187, %v186
  %v198 = vunpack.c.l.b16 %v176
  %v199 = vunpack.c.l.b16 %v177
  %v200 = vunpack.c.l.b16 %v178
  %v201 = vunpack.c.l.b16 %v179
  %v202 = vunpack.c.l.b16 %v180
  %v203 = vunpack.c.l.b16 %v181
  %v204 = vunpack.c.l.b16 %v182
  %v205 = vunpack.c.l.b16 %v183
  %v206 = vpack.c.b16 %v199, %v198
  %v207 = vpack.c.b16 %v201, %v200
  %v208 = vpack.c.b16 %v203, %v202
  %v209 = vpack.c.b16 %v205, %v204
  %vm214 = vcmask 523264
  %v216 = vsel %vm214, %v188, 0
  %v219 = vsel %vm214, %v189, 0
  %221 = vmatprep.subr.bf16.mxu0 0
  %222 = vmatpush1.bf16.msra.mxu0 0
  %223 = vmatprep.subr.bf16.mxu0 0
  %224 = vmatpush1.bf16.msra.mxu0 0
  %225 = vmatprep.subr.bf16.mxu0 0
  %226 = vmatpush1.bf16.msra.mxu0 0
  %227 = vmatprep.subr.bf16.mxu0 0
  %228 = vmatpush1.bf16.msra.mxu0 0
  %229 = vmatprep.subr.bf16.mxu0 0
  %230 = vmatpush1.bf16.msra.mxu0 %v209
  %231 = vmatprep.subr.bf16.mxu0 0
  %232 = vmatpush1.bf16.msra.mxu0 %v208
  %233 = vmatprep.subr.bf16.mxu0 0
  %234 = vmatpush1.bf16.msra.mxu0 %v207
  %235 = vmatprep.subr.bf16.mxu0 0
  %236 = vmatpush1.bf16.msra.mxu0 %v206
  %237 = vmatprep.subr.bf16.mxu0 0
  %238 = vmatpush2.bf16.msra.mxu0 0
  %239 = vmatprep.subr.bf16.mxu0 0
  %240 = vmatpush2.bf16.msra.mxu0 0
  %241 = vmatprep.subr.bf16.mxu0 0
  %242 = vmatpush2.bf16.msra.mxu0 0
  %243 = vmatprep.subr.bf16.mxu0 0
  %244 = vmatpush2.bf16.msra.mxu0 0
  %245 = vmatprep.subr.bf16.mxu0 0
  %246 = vmatpush2.bf16.msra.mxu0 0
  %247 = vmatprep.subr.bf16.mxu0 0
  %248 = vmatpush2.bf16.msra.mxu0 0
  %249 = vmatprep.subr.bf16.mxu0 0
  %250 = vmatpush2.bf16.msra.mxu0 0
  %251 = vmatprep.subr.bf16.mxu0 0
  %252 = vmatpush2.bf16.msra.mxu0 0
  %253 = vmatprep.mubr.bf16.mxu0 0
  %254 = vmatmul.mubr.bf16.gmra.mxu0 %v216
  %v255 = vpop.f32.mrf.mxu0
  %v256 = vadd.f32 0.0, %v255
  %v257 = vpop.f32.mrf.mxu0
  %v258 = vpop.f32.mrf.mxu0
  %v259 = vadd.f32 0.0, %v258
  %v260 = vpop.f32.mrf.mxu0
  %261 = vmatprep.mubr.bf16.mxu0 0
  %262 = vmatmul.mubr.bf16.gmra.mxu0 %v219
  %v263 = vpop.f32.mrf.mxu0
  %v264 = vadd.f32 0.0, %v263
  %v265 = vpop.f32.mrf.mxu0
  %v266 = vpop.f32.mrf.mxu0
  %v267 = vadd.f32 0.0, %v266
  %v268 = vpop.f32.mrf.mxu0
  %269 = vdwg.mxu0
  %v274 = vunpack.c.l.b16 %v110
  %v275 = vunpack.c.l.b16 %v111
  %v276 = vunpack.c.l.b16 %v112
  %v277 = vunpack.c.l.b16 %v113
  %v278 = vpack.c.b16 %v275, %v274
  %v279 = vpack.c.b16 %v277, %v276
  %v288 = vunpack.c.l.b16 %v114
  %v289 = vunpack.c.l.b16 %v115
  %v290 = vunpack.c.l.b16 %v116
  %v291 = vunpack.c.l.b16 %v117
  %v292 = vunpack.c.l.b16 %v118
  %v293 = vunpack.c.l.b16 %v119
  %v294 = vunpack.c.l.b16 %v120
  %v295 = vunpack.c.l.b16 %v121
  %v296 = vpack.c.b16 %v289, %v288
  %v297 = vpack.c.b16 %v291, %v290
  %v298 = vpack.c.b16 %v293, %v292
  %v299 = vpack.c.b16 %v295, %v294
  %v305 = vsel %vm214, %v278, 0
  %v308 = vsel %vm214, %v279, 0
  %310 = vmatprep.subr.bf16.mxu0 0
  %311 = vmatpush1.bf16.msra.mxu0 0
  %312 = vmatprep.subr.bf16.mxu0 0
  %313 = vmatpush1.bf16.msra.mxu0 0
  %314 = vmatprep.subr.bf16.mxu0 0
  %315 = vmatpush1.bf16.msra.mxu0 0
  %316 = vmatprep.subr.bf16.mxu0 0
  %317 = vmatpush1.bf16.msra.mxu0 0
  %318 = vmatprep.subr.bf16.mxu0 0
  %319 = vmatpush1.bf16.msra.mxu0 %v299
  %320 = vmatprep.subr.bf16.mxu0 0
  %321 = vmatpush1.bf16.msra.mxu0 %v298
  %322 = vmatprep.subr.bf16.mxu0 0
  %323 = vmatpush1.bf16.msra.mxu0 %v297
  %324 = vmatprep.subr.bf16.mxu0 0
  %325 = vmatpush1.bf16.msra.mxu0 %v296
  %326 = vmatprep.subr.bf16.mxu0 0
  %327 = vmatpush2.bf16.msra.mxu0 0
  %328 = vmatprep.subr.bf16.mxu0 0
  %329 = vmatpush2.bf16.msra.mxu0 0
  %330 = vmatprep.subr.bf16.mxu0 0
  %331 = vmatpush2.bf16.msra.mxu0 0
  %332 = vmatprep.subr.bf16.mxu0 0
  %333 = vmatpush2.bf16.msra.mxu0 0
  %334 = vmatprep.subr.bf16.mxu0 0
  %335 = vmatpush2.bf16.msra.mxu0 0
  %336 = vmatprep.subr.bf16.mxu0 0
  %337 = vmatpush2.bf16.msra.mxu0 0
  %338 = vmatprep.subr.bf16.mxu0 0
  %339 = vmatpush2.bf16.msra.mxu0 0
  %340 = vmatprep.subr.bf16.mxu0 0
  %341 = vmatpush2.bf16.msra.mxu0 0
  %342 = vmatprep.mubr.bf16.mxu0 0
  %343 = vmatmul.mubr.bf16.gmra.mxu0 %v305
  %v344 = vpop.f32.mrf.mxu0
  %v345 = vadd.f32 %v256, %v344
  %v346 = vpop.f32.mrf.mxu0
  %v347 = vpop.f32.mrf.mxu0
  %v348 = vadd.f32 %v259, %v347
  %v349 = vpop.f32.mrf.mxu0
  %350 = vmatprep.mubr.bf16.mxu0 0
  %351 = vmatmul.mubr.bf16.gmra.mxu0 %v308
  %v352 = vpop.f32.mrf.mxu0
  %v353 = vadd.f32 %v264, %v352
  %v354 = vpop.f32.mrf.mxu0
  %v355 = vpop.f32.mrf.mxu0
  %v356 = vadd.f32 %v267, %v355
  %v357 = vpop.f32.mrf.mxu0
  %358 = vdwg.mxu0
  %v359 = vld [vmem:[#allocation2] sm:$0xe]
  %v360 = vld [vmem:[#allocation2 + $0xc] sm:$0xe]
  %vm365 = vcmask 1042432
  %vm366 = vcmask 1046532
  %vm367 = vmor %vm365, %vm366
  %v368 = vrot.slane %v359, 5
  %v369 = vrot.slane %v368, 4
  %v370 = vrot.slane %v111, 5
  %v371 = vsel %vm367, %v369, %v370
  %v372 = vrot.slane %v370, 4
  %v373 = vrot.slane %v122, 5
  %v374 = vsel %vm367, %v372, %v373
  %v375 = vrot.slane %v360, 5
  %v376 = vrot.slane %v375, 4
  %v377 = vrot.slane %v113, 5
  %v378 = vsel %vm367, %v376, %v377
  %v379 = vrot.slane %v377, 4
  %v380 = vrot.slane %v123, 5
  %v381 = vsel %vm367, %v379, %v380
  %s382 = scalar_lea.vmem %s1, 64
  %v383 = vld [vmem:[%s382] sm:$0xf]
  %v384 = vld [vmem:[%s382 + $0x4] sm:$0xf]
  %v385 = vld [vmem:[%s382 + $0x8] sm:$0xf]
  %v386 = vld [vmem:[%s382 + $0xc] sm:$0xf]
  %v387 = vld [vmem:[%s382 + $0x10] sm:$0xf]
  %v388 = vld [vmem:[%s382 + $0x14] sm:$0xf]
  %v389 = vld [vmem:[%s382 + $0x18] sm:$0xf]
  %v390 = vld [vmem:[%s382 + $0x1c] sm:$0xf]
  %v391 = vunpack.c.l.b16 %v371
  %v392 = vunpack.c.l.b16 %v374
  %v393 = vunpack.c.l.b16 %v378
  %v394 = vunpack.c.l.b16 %v381
  %v395 = vpack.c.b16 %v392, %v391
  %v396 = vpack.c.b16 %v394, %v393
  %v405 = vunpack.c.l.b16 %v383
  %v406 = vunpack.c.l.b16 %v384
  %v407 = vunpack.c.l.b16 %v385
  %v408 = vunpack.c.l.b16 %v386
  %v409 = vunpack.c.l.b16 %v387
  %v410 = vunpack.c.l.b16 %v388
  %v411 = vunpack.c.l.b16 %v389
  %v412 = vunpack.c.l.b16 %v390
  %v413 = vpack.c.b16 %v406, %v405
  %v414 = vpack.c.b16 %v408, %v407
  %v415 = vpack.c.b16 %v410, %v409
  %v416 = vpack.c.b16 %v412, %v411
  %v422 = vsel %vm214, %v395, 0
  %v425 = vsel %vm214, %v396, 0
  %427 = vmatprep.subr.bf16.mxu0 0
  %428 = vmatpush1.bf16.msra.mxu0 0
  %429 = vmatprep.subr.bf16.mxu0 0
  %430 = vmatpush1.bf16.msra.mxu0 0
  %431 = vmatprep.subr.bf16.mxu0 0
  %432 = vmatpush1.bf16.msra.mxu0 0
  %433 = vmatprep.subr.bf16.mxu0 0
  %434 = vmatpush1.bf16.msra.mxu0 0
  %435 = vmatprep.subr.bf16.mxu0 0
  %436 = vmatpush1.bf16.msra.mxu0 %v416
  %437 = vmatprep.subr.bf16.mxu0 0
  %438 = vmatpush1.bf16.msra.mxu0 %v415
  %439 = vmatprep.subr.bf16.mxu0 0
  %440 = vmatpush1.bf16.msra.mxu0 %v414
  %441 = vmatprep.subr.bf16.mxu0 0
  %442 = vmatpush1.bf16.msra.mxu0 %v413
  %443 = vmatprep.subr.bf16.mxu0 0
  %444 = vmatpush2.bf16.msra.mxu0 0
  %445 = vmatprep.subr.bf16.mxu0 0
  %446 = vmatpush2.bf16.msra.mxu0 0
  %447 = vmatprep.subr.bf16.mxu0 0
  %448 = vmatpush2.bf16.msra.mxu0 0
  %449 = vmatprep.subr.bf16.mxu0 0
  %450 = vmatpush2.bf16.msra.mxu0 0
  %451 = vmatprep.subr.bf16.mxu0 0
  %452 = vmatpush2.bf16.msra.mxu0 0
  %453 = vmatprep.subr.bf16.mxu0 0
  %454 = vmatpush2.bf16.msra.mxu0 0
  %455 = vmatprep.subr.bf16.mxu0 0
  %456 = vmatpush2.bf16.msra.mxu0 0
  %457 = vmatprep.subr.bf16.mxu0 0
  %458 = vmatpush2.bf16.msra.mxu0 0
  %459 = vmatprep.mubr.bf16.mxu0 0
  %460 = vmatmul.mubr.bf16.gmra.mxu0 %v422
  %v461 = vpop.f32.mrf.mxu0
  %v462 = vadd.f32 0.0, %v461
  %v463 = vpop.f32.mrf.mxu0
  %v464 = vpop.f32.mrf.mxu0
  %v465 = vadd.f32 0.0, %v464
  %v466 = vpop.f32.mrf.mxu0
  %467 = vmatprep.mubr.bf16.mxu0 0
  %468 = vmatmul.mubr.bf16.gmra.mxu0 %v425
  %v469 = vpop.f32.mrf.mxu0
  %v470 = vadd.f32 0.0, %v469
  %v471 = vpop.f32.mrf.mxu0
  %v472 = vpop.f32.mrf.mxu0
  %v473 = vadd.f32 0.0, %v472
  %v474 = vpop.f32.mrf.mxu0
  %475 = vdwg.mxu0
  %v476 = vadd.f32 %v345, %v462
  %v477 = vadd.f32 %v348, %v465
  %v478 = vadd.f32 %v353, %v470
  %v479 = vadd.f32 %v356, %v473
  %v480 = vld [vmem:[%s2] sm:$0x1]
  %v481 = vld [vmem:[%s3] sm:$0x1]
  %v482 = vadd.f32 %v476, %v477
  %v483 = vadd.f32 %v482, %v478
  %v484 = vadd.f32 %v483, %v479
  %v485 = vrot.slane %v484, 4
  %v486 = vadd.f32 %v484, %v485
  %v487 = vrot.slane %v486, 2
  %v488 = vadd.f32 %v486, %v487
  %v489 = vrot.slane %v488, 1
  %v490 = vadd.f32 %v488, %v489
  %v491 = vld [vmem:[%s7] sm:$0xff]
  %v492 = vld [vmem:[%s7 + $0x8] sm:$0xff]
  %v493 = vld [vmem:[%s7 + $0x10] sm:$0xff]
  %v494 = vld [vmem:[%s7 + $0x18] sm:$0xff]
  %v495 = vld [vmem:[%s7 + $0x20] sm:$0xff]
  %v496 = vld [vmem:[%s7 + $0x28] sm:$0xff]
  %v497 = vld [vmem:[%s7 + $0x30] sm:$0xff]
  %v498 = vld [vmem:[%s7 + $0x38] sm:$0xff]
  %v499 = vld [vmem:[%s7 + $0x40] sm:$0xff]
  %v500 = vld [vmem:[%s7 + $0x48] sm:$0xff]
  %v501 = vld [vmem:[%s7 + $0x50] sm:$0xff]
  %v502 = vld [vmem:[%s7 + $0x58] sm:$0xff]
  %v503 = vld [vmem:[%s7 + $0x60] sm:$0xff]
  %v504 = vld [vmem:[%s7 + $0x68] sm:$0xff]
  %v505 = vld [vmem:[%s7 + $0x70] sm:$0xff]
  %v506 = vld [vmem:[%s7 + $0x78] sm:$0xff]
  %507 = vmatprep.subr.mxu0 0.0
  %508 = vmatpush1.msra.mxu0 %v506
  %509 = vmatprep.subr.mxu0 0.0
  %510 = vmatpush1.msra.mxu0 %v505
  %511 = vmatprep.subr.mxu0 0.0
  %512 = vmatpush1.msra.mxu0 %v504
  %513 = vmatprep.subr.mxu0 0.0
  %514 = vmatpush1.msra.mxu0 %v503
  %515 = vmatprep.subr.mxu0 0.0
  %516 = vmatpush1.msra.mxu0 %v502
  %517 = vmatprep.subr.mxu0 0.0
  %518 = vmatpush1.msra.mxu0 %v501
  %519 = vmatprep.subr.mxu0 0.0
  %520 = vmatpush1.msra.mxu0 %v500
  %521 = vmatprep.subr.mxu0 0.0
  %522 = vmatpush1.msra.mxu0 %v499
  %523 = vmatprep.subr.mxu0 0.0
  %524 = vmatpush1.msra.mxu0 %v498
  %525 = vmatprep.subr.mxu0 0.0
  %526 = vmatpush1.msra.mxu0 %v497
  %527 = vmatprep.subr.mxu0 0.0
  %528 = vmatpush1.msra.mxu0 %v496
  %529 = vmatprep.subr.mxu0 0.0
  %530 = vmatpush1.msra.mxu0 %v495
  %531 = vmatprep.subr.mxu0 0.0
  %532 = vmatpush1.msra.mxu0 %v494
  %533 = vmatprep.subr.mxu0 0.0
  %534 = vmatpush1.msra.mxu0 %v493
  %535 = vmatprep.subr.mxu0 0.0
  %536 = vmatpush1.msra.mxu0 %v492
  %537 = vmatprep.subr.mxu0 0.0
  %538 = vmatpush1.msra.mxu0 %v491
  %539 = vmatprep.subr.mxu0 0.0
  %540 = vmatpush2.msra.mxu0 0.0
  %541 = vmatprep.subr.mxu0 0.0
  %542 = vmatpush2.msra.mxu0 0.0
  %543 = vmatprep.subr.mxu0 0.0
  %544 = vmatpush2.msra.mxu0 0.0
  %545 = vmatprep.subr.mxu0 0.0
  %546 = vmatpush2.msra.mxu0 0.0
  %547 = vmatprep.subr.mxu0 0.0
  %548 = vmatpush2.msra.mxu0 0.0
  %549 = vmatprep.subr.mxu0 0.0
  %550 = vmatpush2.msra.mxu0 0.0
  %551 = vmatprep.subr.mxu0 0.0
  %552 = vmatpush2.msra.mxu0 0.0
  %553 = vmatprep.subr.mxu0 0.0
  %554 = vmatpush2.msra.mxu0 0.0
  %555 = vmatprep.subr.mxu0 0.0
  %556 = vmatpush2.msra.mxu0 0.0
  %557 = vmatprep.subr.mxu0 0.0
  %558 = vmatpush2.msra.mxu0 0.0
  %559 = vmatprep.subr.mxu0 0.0
  %560 = vmatpush2.msra.mxu0 0.0
  %561 = vmatprep.subr.mxu0 0.0
  %562 = vmatpush2.msra.mxu0 0.0
  %563 = vmatprep.subr.mxu0 0.0
  %564 = vmatpush2.msra.mxu0 0.0
  %565 = vmatprep.subr.mxu0 0.0
  %566 = vmatpush2.msra.mxu0 0.0
  %567 = vmatprep.subr.mxu0 0.0
  %568 = vmatpush2.msra.mxu0 0.0
  %569 = vmatprep.subr.mxu0 0.0
  %570 = vmatpush2.msra.mxu0 0.0
  %571 = vmatprep.mubr.f32.mxu0 0.0
  %572 = vmatmul.mubr.f32.gmra.mxu0 %v490
  %v573 = vpop.f32.mrf.mxu0
  %v574 = vadd.f32 0.0, %v573
  %v575 = vpop.f32.mrf.mxu0
  %576 = vdwg.mxu0
  %v577 = vmul.f32 %v574, 0.001953125
  %v578 = vlaneseq
  %v579 = vshrl.u32 %v578, 7
  %v580 = vsub.s32 0, %v579
  %v581 = vrot.slane %v577, %v580
  %v582 = vsub.f32 %v476, %v581
  %v583 = vsub.f32 %v477, %v581
  %v584 = vsub.f32 %v478, %v581
  %v585 = vsub.f32 %v479, %v581
  %v586 = vmul.f32 %v582, %v582
  %v587 = vmul.f32 %v583, %v583
  %v588 = vmul.f32 %v584, %v584
  %v589 = vmul.f32 %v585, %v585
  %v590 = vadd.f32 %v586, %v587
  %v591 = vadd.f32 %v590, %v588
  %v592 = vadd.f32 %v591, %v589
  %v593 = vrot.slane %v592, 4
  %v594 = vadd.f32 %v592, %v593
  %v595 = vrot.slane %v594, 2
  %v596 = vadd.f32 %v594, %v595
  %v597 = vrot.slane %v596, 1
  %v598 = vadd.f32 %v596, %v597
  %599 = vmatprep.subr.mxu0 0.0
  %600 = vmatpush1.msra.mxu0 %v506
  %601 = vmatprep.subr.mxu0 0.0
  %602 = vmatpush1.msra.mxu0 %v505
  %603 = vmatprep.subr.mxu0 0.0
  %604 = vmatpush1.msra.mxu0 %v504
  %605 = vmatprep.subr.mxu0 0.0
  %606 = vmatpush1.msra.mxu0 %v503
  %607 = vmatprep.subr.mxu0 0.0
  %608 = vmatpush1.msra.mxu0 %v502
  %609 = vmatprep.subr.mxu0 0.0
  %610 = vmatpush1.msra.mxu0 %v501
  %611 = vmatprep.subr.mxu0 0.0
  %612 = vmatpush1.msra.mxu0 %v500
  %613 = vmatprep.subr.mxu0 0.0
  %614 = vmatpush1.msra.mxu0 %v499
  %615 = vmatprep.subr.mxu0 0.0
  %616 = vmatpush1.msra.mxu0 %v498
  %617 = vmatprep.subr.mxu0 0.0
  %618 = vmatpush1.msra.mxu0 %v497
  %619 = vmatprep.subr.mxu0 0.0
  %620 = vmatpush1.msra.mxu0 %v496
  %621 = vmatprep.subr.mxu0 0.0
  %622 = vmatpush1.msra.mxu0 %v495
  %623 = vmatprep.subr.mxu0 0.0
  %624 = vmatpush1.msra.mxu0 %v494
  %625 = vmatprep.subr.mxu0 0.0
  %626 = vmatpush1.msra.mxu0 %v493
  %627 = vmatprep.subr.mxu0 0.0
  %628 = vmatpush1.msra.mxu0 %v492
  %629 = vmatprep.subr.mxu0 0.0
  %630 = vmatpush1.msra.mxu0 %v491
  %631 = vmatprep.subr.mxu0 0.0
  %632 = vmatpush2.msra.mxu0 0.0
  %633 = vmatprep.subr.mxu0 0.0
  %634 = vmatpush2.msra.mxu0 0.0
  %635 = vmatprep.subr.mxu0 0.0
  %636 = vmatpush2.msra.mxu0 0.0
  %637 = vmatprep.subr.mxu0 0.0
  %638 = vmatpush2.msra.mxu0 0.0
  %639 = vmatprep.subr.mxu0 0.0
  %640 = vmatpush2.msra.mxu0 0.0
  %641 = vmatprep.subr.mxu0 0.0
  %642 = vmatpush2.msra.mxu0 0.0
  %643 = vmatprep.subr.mxu0 0.0
  %644 = vmatpush2.msra.mxu0 0.0
  %645 = vmatprep.subr.mxu0 0.0
  %646 = vmatpush2.msra.mxu0 0.0
  %647 = vmatprep.subr.mxu0 0.0
  %648 = vmatpush2.msra.mxu0 0.0
  %649 = vmatprep.subr.mxu0 0.0
  %650 = vmatpush2.msra.mxu0 0.0
  %651 = vmatprep.subr.mxu0 0.0
  %652 = vmatpush2.msra.mxu0 0.0
  %653 = vmatprep.subr.mxu0 0.0
  %654 = vmatpush2.msra.mxu0 0.0
  %655 = vmatprep.subr.mxu0 0.0
  %656 = vmatpush2.msra.mxu0 0.0
  %657 = vmatprep.subr.mxu0 0.0
  %658 = vmatpush2.msra.mxu0 0.0
  %659 = vmatprep.subr.mxu0 0.0
  %660 = vmatpush2.msra.mxu0 0.0
  %661 = vmatprep.subr.mxu0 0.0
  %662 = vmatpush2.msra.mxu0 0.0
  %663 = vmatprep.mubr.f32.mxu0 0.0
  %664 = vmatmul.mubr.f32.gmra.mxu0 %v598
  %v665 = vpop.f32.mrf.mxu0
  %v666 = vadd.f32 0.0, %v665
  %v667 = vpop.f32.mrf.mxu0
  %668 = vdwg.mxu0
  %v669 = vmul.f32 %v666, 0.001953125
  %v670 = vadd.f32 %v669, 1e-05
  %v671 = vrsqrt.pop %v670
  %v672 = vmul.f32 %v480, %v671
  %v674 = vlaneseq
  %v675 = vshrl.u32 %v674, 7
  %v676 = vsub.s32 0, %v675
  %v677 = vrot.slane %v672, %v676
  %v679 = vmul.f32 %v582, %v677
  %v680 = vmul.f32 %v583, %v677
  %v681 = vmul.f32 %v584, %v677
  %v682 = vmul.f32 %v585, %v677
  %v684 = vlaneseq
  %v685 = vshrl.u32 %v684, 7
  %v686 = vsub.s32 0, %v685
  %v687 = vrot.slane %v481, %v686
  %v689 = vadd.f32 %v679, %v687
  %v690 = vadd.f32 %v680, %v687
  %v691 = vadd.f32 %v681, %v687
  %v692 = vadd.f32 %v682, %v687
  %v693 = vmax.f32 %v689, 0.0
  %v694 = vmax.f32 %v690, 0.0
  %v695 = vmax.f32 %v691, 0.0
  %v696 = vmax.f32 %v692, 0.0
  %vm697 = vcmask 1040384
  %vm698 = vmand %vm697, %vm31
  %v699 = vld [vmem:[#allocation3] sm:$0x1]
  %v700 = vsel %vm698, 0, %v699
  %701 = vst [vmem:[#allocation3] sm:$0x1] %v700
  %v702 = vld [vmem:[#allocation3 + $0xc] sm:$0x1]
  %v703 = vsel %vm698, 0, %v702
  %704 = vst [vmem:[#allocation3 + $0xc] sm:$0x1] %v703
  %vm705 = vmand %vm697, %vm39
  %v706 = vld [vmem:[#allocation3 + $0x8] sm:$0x1]
  %v707 = vsel %vm705, 0, %v706
  %708 = vst [vmem:[#allocation3 + $0x8] sm:$0x1] %v707
  %v709 = vld [vmem:[#allocation3 + $0x14] sm:$0x1]
  %v710 = vsel %vm705, 0, %v709
  %711 = vst [vmem:[#allocation3 + $0x14] sm:$0x1] %v710
  %v712 = vpack.c.bf16 %v694, %v693
  %v713 = vpack.c.bf16 %v696, %v695
  %v716 = vunpack.c.l.b16 %v712
  %v717 = vunpack.c.h.b16 %v712
  %v718 = vunpack.c.l.b16 %v713
  %v719 = vunpack.c.h.b16 %v713
  %v720 = vpack.c.b16 %v716, %v716
  %v721 = vpack.c.b16 %v717, %v717
  %v722 = vpack.c.b16 %v718, %v718
  %v723 = vpack.c.b16 %v719, %v719
  %v725 = vshrl.u32 %v720, 16
  %v727 = vrot.slane %v725, 7
  %v728 = vshll.u32 %v720, 16
  %v730 = vor.u32 %v727, %v728
  %v731 = vrot.slane %v727, 4
  %v733 = vshrl.u32 %v721, 16
  %v735 = vrot.slane %v733, 7
  %v736 = vshll.u32 %v721, 16
  %v738 = vor.u32 %v735, %v736
  %v739 = vsel %vm52, %v731, %v738
  %v740 = vrot.slane %v735, 4
  %v742 = vshrl.u32 %v722, 16
  %v744 = vrot.slane %v742, 7
  %v745 = vshll.u32 %v722, 16
  %v747 = vor.u32 %v744, %v745
  %v748 = vrot.slane %v744, 4
  %v750 = vshrl.u32 %v723, 16
  %v752 = vrot.slane %v750, 7
  %v753 = vshll.u32 %v723, 16
  %v755 = vor.u32 %v752, %v753
  %v756 = vsel %vm52, %v748, %v755
  %v757 = vrot.slane %v752, 4
  %vm764 = vcmask 1043456
  %vm765 = vmand %vm764, %vm39
  %v766 = vld [vmem:[#allocation3] sm:$0xf]
  %v767 = vsel %vm765, %v730, %v766
  %768 = vst [vmem:[#allocation3] sm:$0xf] %v767
  %769 = vst [vmem:[#allocation3 + $0x4] sm:$0xf] %v739
  %v770 = vld [vmem:[#allocation3 + $0x8] sm:$0x1]
  %v771 = vsel %vm698, %v740, %v770
  %772 = vst [vmem:[#allocation3 + $0x8] sm:$0x1] %v771
  %v773 = vld [vmem:[#allocation3 + $0xc] sm:$0xf]
  %v774 = vsel %vm765, %v747, %v773
  %775 = vst [vmem:[#allocation3 + $0xc] sm:$0xf] %v774
  %776 = vst [vmem:[#allocation3 + $0x10] sm:$0xf] %v756
  %v777 = vld [vmem:[#allocation3 + $0x14] sm:$0x1]
  %v778 = vsel %vm698, %v757, %v777
  %779 = vst [vmem:[#allocation3 + $0x14] sm:$0x1] %v778
  %v780 = vld [vmem:[#allocation3] sm:$0xf]
  %v781 = vld [vmem:[#allocation3 + $0x4] sm:$0xf]
  %v782 = vld [vmem:[#allocation3 + $0xc] sm:$0xf]
  %v783 = vld [vmem:[#allocation3 + $0x10] sm:$0xf]
  %v784 = vld [vmem:[%s4] sm:$0xf]
  %v785 = vld [vmem:[%s4 + $0x4] sm:$0xf]
  %v786 = vld [vmem:[%s4 + $0x8] sm:$0xf]
  %v787 = vld [vmem:[%s4 + $0xc] sm:$0xf]
  %v788 = vld [vmem:[%s4 + $0x10] sm:$0xf]
  %v789 = vld [vmem:[%s4 + $0x14] sm:$0xf]
  %v790 = vld [vmem:[%s4 + $0x18] sm:$0xf]
  %v791 = vld [vmem:[%s4 + $0x1c] sm:$0xf]
  %v792 = vld [vmem:[%s4 + $0x20] sm:$0xf]
  %v793 = vld [vmem:[%s4 + $0x24] sm:$0xf]
  %v794 = vld [vmem:[%s4 + $0x28] sm:$0xf]
  %v795 = vld [vmem:[%s4 + $0x2c] sm:$0xf]
  %v796 = vld [vmem:[%s4 + $0x30] sm:$0xf]
  %v797 = vld [vmem:[%s4 + $0x34] sm:$0xf]
  %v798 = vld [vmem:[%s4 + $0x38] sm:$0xf]
  %v799 = vld [vmem:[%s4 + $0x3c] sm:$0xf]
  %v800 = vld [vmem:[#allocation3 + $0x8] sm:$0x1]
  %v801 = vld [vmem:[#allocation3 + $0x14] sm:$0x1]
  %v803 = vshrl.u32 %v780, 16
  %v805 = vrot.slane %v803, 4
  %v806 = vshll.u32 %v780, 16
  %v808 = vrot.slane %v806, 5
  %v809 = vor.u32 %v805, %v808
  %v810 = vrot.slane %v809, 4
  %v812 = vshll.u32 %v781, 16
  %v814 = vrot.slane %v812, 5
  %v815 = vsel %vm126, %v810, %v814
  %v816 = vshrl.u32 %v781, 16
  %v818 = vrot.slane %v816, 4
  %v819 = vor.u32 %v818, %v814
  %v820 = vrot.slane %v819, 4
  %v822 = vshll.u32 %v800, 16
  %v824 = vrot.slane %v822, 5
  %v825 = vsel %vm126, %v820, %v824
  %v827 = vshrl.u32 %v782, 16
  %v829 = vrot.slane %v827, 4
  %v830 = vshll.u32 %v782, 16
  %v832 = vrot.slane %v830, 5
  %v833 = vor.u32 %v829, %v832
  %v834 = vrot.slane %v833, 4
  %v836 = vshll.u32 %v783, 16
  %v838 = vrot.slane %v836, 5
  %v839 = vsel %vm126, %v834, %v838
  %v840 = vshrl.u32 %v783, 16
  %v842 = vrot.slane %v840, 4
  %v843 = vor.u32 %v842, %v838
  %v844 = vrot.slane %v843, 4
  %v846 = vshll.u32 %v801, 16
  %v848 = vrot.slane %v846, 5
  %v849 = vsel %vm126, %v844, %v848
  %s850 = scalar_lea.vmem %s4, 64
  %v851 = vld [vmem:[%s850] sm:$0xf]
  %v852 = vld [vmem:[%s850 + $0x4] sm:$0xf]
  %v853 = vld [vmem:[%s850 + $0x8] sm:$0xf]
  %v854 = vld [vmem:[%s850 + $0xc] sm:$0xf]
  %v855 = vld [vmem:[%s850 + $0x10] sm:$0xf]
  %v856 = vld [vmem:[%s850 + $0x14] sm:$0xf]
  %v857 = vld [vmem:[%s850 + $0x18] sm:$0xf]
  %v858 = vld [vmem:[%s850 + $0x1c] sm:$0xf]
  %v859 = vld [vmem:[%s850 + $0x20] sm:$0xf]
  %v860 = vld [vmem:[%s850 + $0x24] sm:$0xf]
  %v861 = vld [vmem:[%s850 + $0x28] sm:$0xf]
  %v862 = vld [vmem:[%s850 + $0x2c] sm:$0xf]
  %v863 = vld [vmem:[%s850 + $0x30] sm:$0xf]
  %v864 = vld [vmem:[%s850 + $0x34] sm:$0xf]
  %v865 = vld [vmem:[%s850 + $0x38] sm:$0xf]
  %v866 = vld [vmem:[%s850 + $0x3c] sm:$0xf]
  %v867 = vunpack.c.l.b16 %v815
  %v868 = vunpack.c.l.b16 %v825
  %v869 = vunpack.c.l.b16 %v839
  %v870 = vunpack.c.l.b16 %v849
  %v871 = vpack.c.b16 %v868, %v867
  %v872 = vpack.c.b16 %v870, %v869
  %v891 = vunpack.c.l.b16 %v851
  %v892 = vunpack.c.l.b16 %v852
  %v893 = vunpack.c.l.b16 %v853
  %v894 = vunpack.c.l.b16 %v854
  %v895 = vunpack.c.l.b16 %v855
  %v896 = vunpack.c.l.b16 %v856
  %v897 = vunpack.c.l.b16 %v857
  %v898 = vunpack.c.l.b16 %v858
  %v899 = vunpack.c.l.b16 %v859
  %v900 = vunpack.c.l.b16 %v860
  %v901 = vunpack.c.l.b16 %v861
  %v902 = vunpack.c.l.b16 %v862
  %v903 = vunpack.c.l.b16 %v863
  %v904 = vunpack.c.l.b16 %v864
  %v905 = vunpack.c.l.b16 %v865
  %v906 = vunpack.c.l.b16 %v866
  %v907 = vpack.c.b16 %v892, %v891
  %v908 = vpack.c.b16 %v894, %v893
  %v909 = vpack.c.b16 %v896, %v895
  %v910 = vpack.c.b16 %v898, %v897
  %v911 = vpack.c.b16 %v900, %v899
  %v912 = vpack.c.b16 %v902, %v901
  %v913 = vpack.c.b16 %v904, %v903
  %v914 = vpack.c.b16 %v906, %v905
  %923 = vmatprep.subr.bf16.mxu0 0
  %924 = vmatpush1.bf16.msra.mxu0 %v914
  %925 = vmatprep.subr.bf16.mxu0 0
  %926 = vmatpush1.bf16.msra.mxu0 %v913
  %927 = vmatprep.subr.bf16.mxu0 0
  %928 = vmatpush1.bf16.msra.mxu0 %v912
  %929 = vmatprep.subr.bf16.mxu0 0
  %930 = vmatpush1.bf16.msra.mxu0 %v911
  %931 = vmatprep.subr.bf16.mxu0 0
  %932 = vmatpush1.bf16.msra.mxu0 %v910
  %933 = vmatprep.subr.bf16.mxu0 0
  %934 = vmatpush1.bf16.msra.mxu0 %v909
  %935 = vmatprep.subr.bf16.mxu0 0
  %936 = vmatpush1.bf16.msra.mxu0 %v908
  %937 = vmatprep.subr.bf16.mxu0 0
  %938 = vmatpush1.bf16.msra.mxu0 %v907
  %939 = vmatprep.subr.bf16.mxu0 0
  %940 = vmatpush2.bf16.msra.mxu0 0
  %941 = vmatprep.subr.bf16.mxu0 0
  %942 = vmatpush2.bf16.msra.mxu0 0
  %943 = vmatprep.subr.bf16.mxu0 0
  %944 = vmatpush2.bf16.msra.mxu0 0
  %945 = vmatprep.subr.bf16.mxu0 0
  %946 = vmatpush2.bf16.msra.mxu0 0
  %947 = vmatprep.subr.bf16.mxu0 0
  %948 = vmatpush2.bf16.msra.mxu0 0
  %949 = vmatprep.subr.bf16.mxu0 0
  %950 = vmatpush2.bf16.msra.mxu0 0
  %951 = vmatprep.subr.bf16.mxu0 0
  %952 = vmatpush2.bf16.msra.mxu0 0
  %953 = vmatprep.subr.bf16.mxu0 0
  %954 = vmatpush2.bf16.msra.mxu0 0
  %955 = vmatprep.mubr.bf16.mxu0 0
  %956 = vmatmul.mubr.bf16.gmra.mxu0 %v871
  %v957 = vpop.f32.mrf.mxu0
  %v958 = vadd.f32 0.0, %v957
  %v959 = vpop.f32.mrf.mxu0
  %v960 = vpop.f32.mrf.mxu0
  %v961 = vadd.f32 0.0, %v960
  %v962 = vpop.f32.mrf.mxu0
  %963 = vmatprep.mubr.bf16.mxu0 0
  %964 = vmatmul.mubr.bf16.gmra.mxu0 %v872
  %v965 = vpop.f32.mrf.mxu0
  %v966 = vadd.f32 0.0, %v965
  %v967 = vpop.f32.mrf.mxu0
  %v968 = vpop.f32.mrf.mxu0
  %v969 = vadd.f32 0.0, %v968
  %v970 = vpop.f32.mrf.mxu0
  %971 = vdwg.mxu0
  %v976 = vunpack.c.l.b16 %v780
  %v977 = vunpack.c.l.b16 %v781
  %v978 = vunpack.c.l.b16 %v782
  %v979 = vunpack.c.l.b16 %v783
  %v980 = vpack.c.b16 %v977, %v976
  %v981 = vpack.c.b16 %v979, %v978
  %v1000 = vunpack.c.l.b16 %v784
  %v1001 = vunpack.c.l.b16 %v785
  %v1002 = vunpack.c.l.b16 %v786
  %v1003 = vunpack.c.l.b16 %v787
  %v1004 = vunpack.c.l.b16 %v788
  %v1005 = vunpack.c.l.b16 %v789
  %v1006 = vunpack.c.l.b16 %v790
  %v1007 = vunpack.c.l.b16 %v791
  %v1008 = vunpack.c.l.b16 %v792
  %v1009 = vunpack.c.l.b16 %v793
  %v1010 = vunpack.c.l.b16 %v794
  %v1011 = vunpack.c.l.b16 %v795
  %v1012 = vunpack.c.l.b16 %v796
  %v1013 = vunpack.c.l.b16 %v797
  %v1014 = vunpack.c.l.b16 %v798
  %v1015 = vunpack.c.l.b16 %v799
  %v1016 = vpack.c.b16 %v1001, %v1000
  %v1017 = vpack.c.b16 %v1003, %v1002
  %v1018 = vpack.c.b16 %v1005, %v1004
  %v1019 = vpack.c.b16 %v1007, %v1006
  %v1020 = vpack.c.b16 %v1009, %v1008
  %v1021 = vpack.c.b16 %v1011, %v1010
  %v1022 = vpack.c.b16 %v1013, %v1012
  %v1023 = vpack.c.b16 %v1015, %v1014
  %1032 = vmatprep.subr.bf16.mxu0 0
  %1033 = vmatpush1.bf16.msra.mxu0 %v1023
  %1034 = vmatprep.subr.bf16.mxu0 0
  %1035 = vmatpush1.bf16.msra.mxu0 %v1022
  %1036 = vmatprep.subr.bf16.mxu0 0
  %1037 = vmatpush1.bf16.msra.mxu0 %v1021
  %1038 = vmatprep.subr.bf16.mxu0 0
  %1039 = vmatpush1.bf16.msra.mxu0 %v1020
  %1040 = vmatprep.subr.bf16.mxu0 0
  %1041 = vmatpush1.bf16.msra.mxu0 %v1019
  %1042 = vmatprep.subr.bf16.mxu0 0
  %1043 = vmatpush1.bf16.msra.mxu0 %v1018
  %1044 = vmatprep.subr.bf16.mxu0 0
  %1045 = vmatpush1.bf16.msra.mxu0 %v1017
  %1046 = vmatprep.subr.bf16.mxu0 0
  %1047 = vmatpush1.bf16.msra.mxu0 %v1016
  %1048 = vmatprep.subr.bf16.mxu0 0
  %1049 = vmatpush2.bf16.msra.mxu0 0
  %1050 = vmatprep.subr.bf16.mxu0 0
  %1051 = vmatpush2.bf16.msra.mxu0 0
  %1052 = vmatprep.subr.bf16.mxu0 0
  %1053 = vmatpush2.bf16.msra.mxu0 0
  %1054 = vmatprep.subr.bf16.mxu0 0
  %1055 = vmatpush2.bf16.msra.mxu0 0
  %1056 = vmatprep.subr.bf16.mxu0 0
  %1057 = vmatpush2.bf16.msra.mxu0 0
  %1058 = vmatprep.subr.bf16.mxu0 0
  %1059 = vmatpush2.bf16.msra.mxu0 0
  %1060 = vmatprep.subr.bf16.mxu0 0
  %1061 = vmatpush2.bf16.msra.mxu0 0
  %1062 = vmatprep.subr.bf16.mxu0 0
  %1063 = vmatpush2.bf16.msra.mxu0 0
  %1064 = vmatprep.mubr.bf16.mxu0 0
  %1065 = vmatmul.mubr.bf16.gmra.mxu0 %v980
  %v1066 = vpop.f32.mrf.mxu0
  %v1067 = vadd.f32 %v958, %v1066
  %v1068 = vpop.f32.mrf.mxu0
  %v1069 = vpop.f32.mrf.mxu0
  %v1070 = vadd.f32 %v961, %v1069
  %v1071 = vpop.f32.mrf.mxu0
  %1072 = vmatprep.mubr.bf16.mxu0 0
  %1073 = vmatmul.mubr.bf16.gmra.mxu0 %v981
  %v1074 = vpop.f32.mrf.mxu0
  %v1075 = vadd.f32 %v966, %v1074
  %v1076 = vpop.f32.mrf.mxu0
  %v1077 = vpop.f32.mrf.mxu0
  %v1078 = vadd.f32 %v969, %v1077
  %v1079 = vpop.f32.mrf.mxu0
  %1080 = vdwg.mxu0
  %v1081 = vld [vmem:[#allocation3] sm:$0xe]
  %v1082 = vld [vmem:[#allocation3 + $0xc] sm:$0xe]
  %v1087 = vrot.slane %v1081, 5
  %v1088 = vrot.slane %v1087, 4
  %v1089 = vrot.slane %v781, 5
  %v1090 = vsel %vm367, %v1088, %v1089
  %v1091 = vrot.slane %v1089, 4
  %v1092 = vrot.slane %v800, 5
  %v1093 = vsel %vm367, %v1091, %v1092
  %v1094 = vrot.slane %v1082, 5
  %v1095 = vrot.slane %v1094, 4
  %v1096 = vrot.slane %v783, 5
  %v1097 = vsel %vm367, %v1095, %v1096
  %v1098 = vrot.slane %v1096, 4
  %v1099 = vrot.slane %v801, 5
  %v1100 = vsel %vm367, %v1098, %v1099
  %s1101 = scalar_lea.vmem %s4, 128
  %v1102 = vld [vmem:[%s1101] sm:$0xf]
  %v1103 = vld [vmem:[%s1101 + $0x4] sm:$0xf]
  %v1104 = vld [vmem:[%s1101 + $0x8] sm:$0xf]
  %v1105 = vld [vmem:[%s1101 + $0xc] sm:$0xf]
  %v1106 = vld [vmem:[%s1101 + $0x10] sm:$0xf]
  %v1107 = vld [vmem:[%s1101 + $0x14] sm:$0xf]
  %v1108 = vld [vmem:[%s1101 + $0x18] sm:$0xf]
  %v1109 = vld [vmem:[%s1101 + $0x1c] sm:$0xf]
  %v1110 = vld [vmem:[%s1101 + $0x20] sm:$0xf]
  %v1111 = vld [vmem:[%s1101 + $0x24] sm:$0xf]
  %v1112 = vld [vmem:[%s1101 + $0x28] sm:$0xf]
  %v1113 = vld [vmem:[%s1101 + $0x2c] sm:$0xf]
  %v1114 = vld [vmem:[%s1101 + $0x30] sm:$0xf]
  %v1115 = vld [vmem:[%s1101 + $0x34] sm:$0xf]
  %v1116 = vld [vmem:[%s1101 + $0x38] sm:$0xf]
  %v1117 = vld [vmem:[%s1101 + $0x3c] sm:$0xf]
  %v1118 = vunpack.c.l.b16 %v1090
  %v1119 = vunpack.c.l.b16 %v1093
  %v1120 = vunpack.c.l.b16 %v1097
  %v1121 = vunpack.c.l.b16 %v1100
  %v1122 = vpack.c.b16 %v1119, %v1118
  %v1123 = vpack.c.b16 %v1121, %v1120
  %v1142 = vunpack.c.l.b16 %v1102
  %v1143 = vunpack.c.l.b16 %v1103
  %v1144 = vunpack.c.l.b16 %v1104
  %v1145 = vunpack.c.l.b16 %v1105
  %v1146 = vunpack.c.l.b16 %v1106
  %v1147 = vunpack.c.l.b16 %v1107
  %v1148 = vunpack.c.l.b16 %v1108
  %v1149 = vunpack.c.l.b16 %v1109
  %v1150 = vunpack.c.l.b16 %v1110
  %v1151 = vunpack.c.l.b16 %v1111
  %v1152 = vunpack.c.l.b16 %v1112
  %v1153 = vunpack.c.l.b16 %v1113
  %v1154 = vunpack.c.l.b16 %v1114
  %v1155 = vunpack.c.l.b16 %v1115
  %v1156 = vunpack.c.l.b16 %v1116
  %v1157 = vunpack.c.l.b16 %v1117
  %v1158 = vpack.c.b16 %v1143, %v1142
  %v1159 = vpack.c.b16 %v1145, %v1144
  %v1160 = vpack.c.b16 %v1147, %v1146
  %v1161 = vpack.c.b16 %v1149, %v1148
  %v1162 = vpack.c.b16 %v1151, %v1150
  %v1163 = vpack.c.b16 %v1153, %v1152
  %v1164 = vpack.c.b16 %v1155, %v1154
  %v1165 = vpack.c.b16 %v1157, %v1156
  %1174 = vmatprep.subr.bf16.mxu0 0
  %1175 = vmatpush1.bf16.msra.mxu0 %v1165
  %1176 = vmatprep.subr.bf16.mxu0 0
  %1177 = vmatpush1.bf16.msra.mxu0 %v1164
  %1178 = vmatprep.subr.bf16.mxu0 0
  %1179 = vmatpush1.bf16.msra.mxu0 %v1163
  %1180 = vmatprep.subr.bf16.mxu0 0
  %1181 = vmatpush1.bf16.msra.mxu0 %v1162
  %1182 = vmatprep.subr.bf16.mxu0 0
  %1183 = vmatpush1.bf16.msra.mxu0 %v1161
  %1184 = vmatprep.subr.bf16.mxu0 0
  %1185 = vmatpush1.bf16.msra.mxu0 %v1160
  %1186 = vmatprep.subr.bf16.mxu0 0
  %1187 = vmatpush1.bf16.msra.mxu0 %v1159
  %1188 = vmatprep.subr.bf16.mxu0 0
  %1189 = vmatpush1.bf16.msra.mxu0 %v1158
  %1190 = vmatprep.subr.bf16.mxu0 0
  %1191 = vmatpush2.bf16.msra.mxu0 0
  %1192 = vmatprep.subr.bf16.mxu0 0
  %1193 = vmatpush2.bf16.msra.mxu0 0
  %1194 = vmatprep.subr.bf16.mxu0 0
  %1195 = vmatpush2.bf16.msra.mxu0 0
  %1196 = vmatprep.subr.bf16.mxu0 0
  %1197 = vmatpush2.bf16.msra.mxu0 0
  %1198 = vmatprep.subr.bf16.mxu0 0
  %1199 = vmatpush2.bf16.msra.mxu0 0
  %1200 = vmatprep.subr.bf16.mxu0 0
  %1201 = vmatpush2.bf16.msra.mxu0 0
  %1202 = vmatprep.subr.bf16.mxu0 0
  %1203 = vmatpush2.bf16.msra.mxu0 0
  %1204 = vmatprep.subr.bf16.mxu0 0
  %1205 = vmatpush2.bf16.msra.mxu0 0
  %1206 = vmatprep.mubr.bf16.mxu0 0
  %1207 = vmatmul.mubr.bf16.gmra.mxu0 %v1122
  %v1208 = vpop.f32.mrf.mxu0
  %v1209 = vadd.f32 0.0, %v1208
  %v1210 = vpop.f32.mrf.mxu0
  %v1211 = vpop.f32.mrf.mxu0
  %v1212 = vadd.f32 0.0, %v1211
  %v1213 = vpop.f32.mrf.mxu0
  %1214 = vmatprep.mubr.bf16.mxu0 0
  %1215 = vmatmul.mubr.bf16.gmra.mxu0 %v1123
  %v1216 = vpop.f32.mrf.mxu0
  %v1217 = vadd.f32 0.0, %v1216
  %v1218 = vpop.f32.mrf.mxu0
  %v1219 = vpop.f32.mrf.mxu0
  %v1220 = vadd.f32 0.0, %v1219
  %v1221 = vpop.f32.mrf.mxu0
  %1222 = vdwg.mxu0
  %v1223 = vadd.f32 %v1067, %v1209
  %v1224 = vadd.f32 %v1070, %v1212
  %v1225 = vadd.f32 %v1075, %v1217
  %v1226 = vadd.f32 %v1078, %v1220
  %v1227 = vld [vmem:[%s5] sm:$0x1]
  %v1228 = vld [vmem:[%s6] sm:$0x1]
  %v1229 = vadd.f32 %v1223, %v1224
  %v1230 = vadd.f32 %v1229, %v1225
  %v1231 = vadd.f32 %v1230, %v1226
  %v1232 = vrot.slane %v1231, 4
  %v1233 = vadd.f32 %v1231, %v1232
  %v1234 = vrot.slane %v1233, 2
  %v1235 = vadd.f32 %v1233, %v1234
  %v1236 = vrot.slane %v1235, 1
  %v1237 = vadd.f32 %v1235, %v1236
  %v1238 = vld [vmem:[%s7] sm:$0xff]
  %v1239 = vld [vmem:[%s7 + $0x8] sm:$0xff]
  %v1240 = vld [vmem:[%s7 + $0x10] sm:$0xff]
  %v1241 = vld [vmem:[%s7 + $0x18] sm:$0xff]
  %v1242 = vld [vmem:[%s7 + $0x20] sm:$0xff]
  %v1243 = vld [vmem:[%s7 + $0x28] sm:$0xff]
  %v1244 = vld [vmem:[%s7 + $0x30] sm:$0xff]
  %v1245 = vld [vmem:[%s7 + $0x38] sm:$0xff]
  %v1246 = vld [vmem:[%s7 + $0x40] sm:$0xff]
  %v1247 = vld [vmem:[%s7 + $0x48] sm:$0xff]
  %v1248 = vld [vmem:[%s7 + $0x50] sm:$0xff]
  %v1249 = vld [vmem:[%s7 + $0x58] sm:$0xff]
  %v1250 = vld [vmem:[%s7 + $0x60] sm:$0xff]
  %v1251 = vld [vmem:[%s7 + $0x68] sm:$0xff]
  %v1252 = vld [vmem:[%s7 + $0x70] sm:$0xff]
  %v1253 = vld [vmem:[%s7 + $0x78] sm:$0xff]
  %1254 = vmatprep.subr.mxu0 0.0
  %1255 = vmatpush1.msra.mxu0 %v1253
  %1256 = vmatprep.subr.mxu0 0.0
  %1257 = vmatpush1.msra.mxu0 %v1252
  %1258 = vmatprep.subr.mxu0 0.0
  %1259 = vmatpush1.msra.mxu0 %v1251
  %1260 = vmatprep.subr.mxu0 0.0
  %1261 = vmatpush1.msra.mxu0 %v1250
  %1262 = vmatprep.subr.mxu0 0.0
  %1263 = vmatpush1.msra.mxu0 %v1249
  %1264 = vmatprep.subr.mxu0 0.0
  %1265 = vmatpush1.msra.mxu0 %v1248
  %1266 = vmatprep.subr.mxu0 0.0
  %1267 = vmatpush1.msra.mxu0 %v1247
  %1268 = vmatprep.subr.mxu0 0.0
  %1269 = vmatpush1.msra.mxu0 %v1246
  %1270 = vmatprep.subr.mxu0 0.0
  %1271 = vmatpush1.msra.mxu0 %v1245
  %1272 = vmatprep.subr.mxu0 0.0
  %1273 = vmatpush1.msra.mxu0 %v1244
  %1274 = vmatprep.subr.mxu0 0.0
  %1275 = vmatpush1.msra.mxu0 %v1243
  %1276 = vmatprep.subr.mxu0 0.0
  %1277 = vmatpush1.msra.mxu0 %v1242
  %1278 = vmatprep.subr.mxu0 0.0
  %1279 = vmatpush1.msra.mxu0 %v1241
  %1280 = vmatprep.subr.mxu0 0.0
  %1281 = vmatpush1.msra.mxu0 %v1240
  %1282 = vmatprep.subr.mxu0 0.0
  %1283 = vmatpush1.msra.mxu0 %v1239
  %1284 = vmatprep.subr.mxu0 0.0
  %1285 = vmatpush1.msra.mxu0 %v1238
  %1286 = vmatprep.subr.mxu0 0.0
  %1287 = vmatpush2.msra.mxu0 0.0
  %1288 = vmatprep.subr.mxu0 0.0
  %1289 = vmatpush2.msra.mxu0 0.0
  %1290 = vmatprep.subr.mxu0 0.0
  %1291 = vmatpush2.msra.mxu0 0.0
  %1292 = vmatprep.subr.mxu0 0.0
  %1293 = vmatpush2.msra.mxu0 0.0
  %1294 = vmatprep.subr.mxu0 0.0
  %1295 = vmatpush2.msra.mxu0 0.0
  %1296 = vmatprep.subr.mxu0 0.0
  %1297 = vmatpush2.msra.mxu0 0.0
  %1298 = vmatprep.subr.mxu0 0.0
  %1299 = vmatpush2.msra.mxu0 0.0
  %1300 = vmatprep.subr.mxu0 0.0
  %1301 = vmatpush2.msra.mxu0 0.0
  %1302 = vmatprep.subr.mxu0 0.0
  %1303 = vmatpush2.msra.mxu0 0.0
  %1304 = vmatprep.subr.mxu0 0.0
  %1305 = vmatpush2.msra.mxu0 0.0
  %1306 = vmatprep.subr.mxu0 0.0
  %1307 = vmatpush2.msra.mxu0 0.0
  %1308 = vmatprep.subr.mxu0 0.0
  %1309 = vmatpush2.msra.mxu0 0.0
  %1310 = vmatprep.subr.mxu0 0.0
  %1311 = vmatpush2.msra.mxu0 0.0
  %1312 = vmatprep.subr.mxu0 0.0
  %1313 = vmatpush2.msra.mxu0 0.0
  %1314 = vmatprep.subr.mxu0 0.0
  %1315 = vmatpush2.msra.mxu0 0.0
  %1316 = vmatprep.subr.mxu0 0.0
  %1317 = vmatpush2.msra.mxu0 0.0
  %1318 = vmatprep.mubr.f32.mxu0 0.0
  %1319 = vmatmul.mubr.f32.gmra.mxu0 %v1237
  %v1320 = vpop.f32.mrf.mxu0
  %v1321 = vadd.f32 0.0, %v1320
  %v1322 = vpop.f32.mrf.mxu0
  %1323 = vdwg.mxu0
  %v1324 = vmul.f32 %v1321, 0.001953125
  %v1325 = vlaneseq
  %v1326 = vshrl.u32 %v1325, 7
  %v1327 = vsub.s32 0, %v1326
  %v1328 = vrot.slane %v1324, %v1327
  %v1329 = vsub.f32 %v1223, %v1328
  %v1330 = vsub.f32 %v1224, %v1328
  %v1331 = vsub.f32 %v1225, %v1328
  %v1332 = vsub.f32 %v1226, %v1328
  %v1333 = vmul.f32 %v1329, %v1329
  %v1334 = vmul.f32 %v1330, %v1330
  %v1335 = vmul.f32 %v1331, %v1331
  %v1336 = vmul.f32 %v1332, %v1332
  %v1337 = vadd.f32 %v1333, %v1334
  %v1338 = vadd.f32 %v1337, %v1335
  %v1339 = vadd.f32 %v1338, %v1336
  %v1340 = vrot.slane %v1339, 4
  %v1341 = vadd.f32 %v1339, %v1340
  %v1342 = vrot.slane %v1341, 2
  %v1343 = vadd.f32 %v1341, %v1342
  %v1344 = vrot.slane %v1343, 1
  %v1345 = vadd.f32 %v1343, %v1344
  %1346 = vmatprep.subr.mxu0 0.0
  %1347 = vmatpush1.msra.mxu0 %v1253
  %1348 = vmatprep.subr.mxu0 0.0
  %1349 = vmatpush1.msra.mxu0 %v1252
  %1350 = vmatprep.subr.mxu0 0.0
  %1351 = vmatpush1.msra.mxu0 %v1251
  %1352 = vmatprep.subr.mxu0 0.0
  %1353 = vmatpush1.msra.mxu0 %v1250
  %1354 = vmatprep.subr.mxu0 0.0
  %1355 = vmatpush1.msra.mxu0 %v1249
  %1356 = vmatprep.subr.mxu0 0.0
  %1357 = vmatpush1.msra.mxu0 %v1248
  %1358 = vmatprep.subr.mxu0 0.0
  %1359 = vmatpush1.msra.mxu0 %v1247
  %1360 = vmatprep.subr.mxu0 0.0
  %1361 = vmatpush1.msra.mxu0 %v1246
  %1362 = vmatprep.subr.mxu0 0.0
  %1363 = vmatpush1.msra.mxu0 %v1245
  %1364 = vmatprep.subr.mxu0 0.0
  %1365 = vmatpush1.msra.mxu0 %v1244
  %1366 = vmatprep.subr.mxu0 0.0
  %1367 = vmatpush1.msra.mxu0 %v1243
  %1368 = vmatprep.subr.mxu0 0.0
  %1369 = vmatpush1.msra.mxu0 %v1242
  %1370 = vmatprep.subr.mxu0 0.0
  %1371 = vmatpush1.msra.mxu0 %v1241
  %1372 = vmatprep.subr.mxu0 0.0
  %1373 = vmatpush1.msra.mxu0 %v1240
  %1374 = vmatprep.subr.mxu0 0.0
  %1375 = vmatpush1.msra.mxu0 %v1239
  %1376 = vmatprep.subr.mxu0 0.0
  %1377 = vmatpush1.msra.mxu0 %v1238
  %1378 = vmatprep.subr.mxu0 0.0
  %1379 = vmatpush2.msra.mxu0 0.0
  %1380 = vmatprep.subr.mxu0 0.0
  %1381 = vmatpush2.msra.mxu0 0.0
  %1382 = vmatprep.subr.mxu0 0.0
  %1383 = vmatpush2.msra.mxu0 0.0
  %1384 = vmatprep.subr.mxu0 0.0
  %1385 = vmatpush2.msra.mxu0 0.0
  %1386 = vmatprep.subr.mxu0 0.0
  %1387 = vmatpush2.msra.mxu0 0.0
  %1388 = vmatprep.subr.mxu0 0.0
  %1389 = vmatpush2.msra.mxu0 0.0
  %1390 = vmatprep.subr.mxu0 0.0
  %1391 = vmatpush2.msra.mxu0 0.0
  %1392 = vmatprep.subr.mxu0 0.0
  %1393 = vmatpush2.msra.mxu0 0.0
  %1394 = vmatprep.subr.mxu0 0.0
  %1395 = vmatpush2.msra.mxu0 0.0
  %1396 = vmatprep.subr.mxu0 0.0
  %1397 = vmatpush2.msra.mxu0 0.0
  %1398 = vmatprep.subr.mxu0 0.0
  %1399 = vmatpush2.msra.mxu0 0.0
  %1400 = vmatprep.subr.mxu0 0.0
  %1401 = vmatpush2.msra.mxu0 0.0
  %1402 = vmatprep.subr.mxu0 0.0
  %1403 = vmatpush2.msra.mxu0 0.0
  %1404 = vmatprep.subr.mxu0 0.0
  %1405 = vmatpush2.msra.mxu0 0.0
  %1406 = vmatprep.subr.mxu0 0.0
  %1407 = vmatpush2.msra.mxu0 0.0
  %1408 = vmatprep.subr.mxu0 0.0
  %1409 = vmatpush2.msra.mxu0 0.0
  %1410 = vmatprep.mubr.f32.mxu0 0.0
  %1411 = vmatmul.mubr.f32.gmra.mxu0 %v1345
  %v1412 = vpop.f32.mrf.mxu0
  %v1413 = vadd.f32 0.0, %v1412
  %v1414 = vpop.f32.mrf.mxu0
  %1415 = vdwg.mxu0
  %v1416 = vmul.f32 %v1413, 0.001953125
  %v1417 = vadd.f32 %v1416, 1e-05
  %v1418 = vrsqrt.pop %v1417
  %v1419 = vmul.f32 %v1227, %v1418
  %v1421 = vlaneseq
  %v1422 = vshrl.u32 %v1421, 7
  %v1423 = vsub.s32 0, %v1422
  %v1424 = vrot.slane %v1419, %v1423
  %v1426 = vmul.f32 %v1329, %v1424
  %v1427 = vmul.f32 %v1330, %v1424
  %v1428 = vmul.f32 %v1331, %v1424
  %v1429 = vmul.f32 %v1332, %v1424
  %v1431 = vlaneseq
  %v1432 = vshrl.u32 %v1431, 7
  %v1433 = vsub.s32 0, %v1432
  %v1434 = vrot.slane %v1228, %v1433
  %v1436 = vadd.f32 %v1426, %v1434
  %v1437 = vadd.f32 %v1427, %v1434
  %v1438 = vadd.f32 %v1428, %v1434
  %v1439 = vadd.f32 %v1429, %v1434
  %v1440 = vmax.f32 %v1436, 0.0
  %v1441 = vmax.f32 %v1437, 0.0
  %v1442 = vmax.f32 %v1438, 0.0
  %v1443 = vmax.f32 %v1439, 0.0
  %1444 = vst [vmem:[%s8] sm:$0xff] %v1440
  %1445 = vst [vmem:[%s8 + $0x8] sm:$0xff] %v1441
  %1446 = vst [vmem:[%s8 + $0x10] sm:$0xff] %v1442
  %1447 = vst [vmem:[%s8 + $0x18] sm:$0xff] %v1443
  // Predicated region
  $region34: #{double_conv2d.1} parent=0 // pred_check
    _
  $region35: #{double_conv2d.1} parent=0 // pred_check_branch
    %1449 = sbr.rel (0) target = $region37
  $region36: #{double_conv2d.1} parent=0 // pred_region
    _
  $region37: #{double_conv2d.1} parent=0 // pred_fallthru
    _
  // Predicated region
  $region38: #{double_conv2d.1} parent=0 // pred_check
    _
  $region39: #{double_conv2d.1} parent=0 // pred_check_branch
    %1451 = sbr.rel (0) target = $region41
  $region40: #{double_conv2d.1} parent=0 // pred_region
    _
  $region41: #{double_conv2d.1} parent=0 // pred_fallthru
    _

</llo_original>
